<compile_context>
chip_gen: v5e
topology: v5e:2x2
jax: 0.10.0
libtpu: 0.0.40
codegen_flags: <defaults>
</compile_context>

<pallas_src>
import numpy as np
import jax
import jax.numpy as jnp
from jax.experimental import pallas as pl
from jax.experimental.pallas import tpu as pltpu

# ---------------- Config (small synthetic ViT) ----------------
B      = 2             # batch
C      = 3             # input channels (ViT default num_channels=3)
IMG    = 16            # image height = width
P      = 8             # patch size
N      = (IMG // P) ** 2   # num patches = 4
S      = N + 1             # sequence length incl. CLS = 5
BS     = B * S             # row-stacked real tokens = 10
BS_PAD = 16                # padded to a full 8-sublane multiple
H      = 32            # hidden size
NH     = 2             # attention heads
HD     = H // NH       # head dim = 16
M      = 64            # MLP intermediate size
L      = 2             # transformer layers
NCLS   = 10            # num classes
LANE   = 128           # lane-padded logits width
EPS    = 1e-12         # HF ViT layer_norm_eps default
DP     = C * P * P     # flattened patch dim = 192
NSEG   = -(-BS_PAD // S)   # number of S-sized segments covering the padded rows

# ---- misc slab row offsets (8-row aligned sections, H columns) ----
R_WPE  = 0                 # w_pe rows [0, DP)
R_POS  = DP                # padded+tiled positional embedding rows [DP, DP+BS_PAD)
R_LNFW = DP + BS_PAD       # final LN gamma (1 row)
R_LNFB = R_LNFW + 8        # final LN beta  (1 row)
MISC_ROWS = R_LNFB + 8

# ---- per-layer bias/LN slab lane offsets (width BIAS_W) ----
O_LN1W, O_LN1B = 0, H
O_BQKV = 2 * H             # width 3H
O_BO   = 5 * H
O_LN2W, O_LN2B = 6 * H, 7 * H
O_B1   = 8 * H             # width M
O_B2   = 8 * H + M
BIAS_W = 9 * H + M         # 352

# ---- per-layer weight slab lane offsets (H rows, width WA_W) ----
O_WQKV = 0                 # width 3H
O_WO   = 3 * H
O_W1   = 4 * H             # width M
WA_W   = 4 * H + M         # 192


# ---------------- In-kernel math helpers ----------------
def _layernorm(x, g, b):
    mu = jnp.mean(x, axis=-1, keepdims=True)
    var = jnp.mean((x - mu) ** 2, axis=-1, keepdims=True)
    return (x - mu) * jax.lax.rsqrt(var + EPS) * g + b


def _erf(z):
    # Abramowitz & Stegun 7.1.26 rational approximation, |err| < 1.5e-7.
    # Only abs/mul/add/exp/select -> VPU + EUP slots; guaranteed to lower in Mosaic.
    az = jnp.abs(z)
    t = 1.0 / (1.0 + 0.3275911 * az)
    poly = t * (0.254829592 + t * (-0.284496736 + t * (1.421413741 +
           t * (-1.453152027 + t * 1.061405429))))
    y = 1.0 - poly * jnp.exp(-az * az)
    return jnp.where(z < 0.0, -y, y)


def _gelu_exact(x):
    # HF ViT default is exact (erf) GELU; matched here to ~1.5e-7.
    return 0.5 * x * (1.0 + _erf(x * np.float32(1.0 / np.sqrt(2.0))))


# ---------------- Pallas kernel: whole batch in one invocation ----------------
def vit_kernel(patches_ref, misc_ref, wA_ref, w2_ref, bias_ref, head_ref, out_ref):
    w_pe  = misc_ref[R_WPE:R_WPE + DP, :]                      # (DP, H)
    pos   = misc_ref[R_POS:R_POS + BS_PAD, :]                  # (BS_PAD, H)
    lnf_w = misc_ref[R_LNFW:R_LNFW + 1, :]                     # (1, H)
    lnf_b = misc_ref[R_LNFB:R_LNFB + 1, :]                     # (1, H)

    # Block-diagonal additive attention mask built from iota segment-id compares
    # (no materialized (BS,BS) slab, no integer divide).  Padded rows only attend
    # among themselves and are never read back, so they cannot pollute real rows.
    ri = jax.lax.broadcasted_iota(jnp.int32, (BS_PAD, BS_PAD), 0)
    ci = jax.lax.broadcasted_iota(jnp.int32, (BS_PAD, BS_PAD), 1)
    same = (ri >= S) == (ci >= S)
    for kseg in range(2, NSEG):
        same = jnp.logical_and(same, (ri >= kseg * S) == (ci >= kseg * S))
    amask = jnp.where(same, 0.0, -1e30).astype(jnp.float32)    # (BS_PAD, BS_PAD)

    # patch embedding (CLS / padded rows of `patches` are zero; CLS token + conv bias
    # are pre-folded into the positional-embedding constant)
    x = jnp.dot(patches_ref[...], w_pe,
                preferred_element_type=jnp.float32) + pos       # (BS_PAD, H)

    scale = np.float32(1.0 / np.sqrt(HD))
    for l in range(L):                                          # static unroll (L=2)
        ln1_w = bias_ref[l, :, O_LN1W:O_LN1W + H]
        ln1_b = bias_ref[l, :, O_LN1B:O_LN1B + H]
        bqkv  = bias_ref[l, :, O_BQKV:O_BQKV + 3 * H]
        bo    = bias_ref[l, :, O_BO:O_BO + H]
        ln2_w = bias_ref[l, :, O_LN2W:O_LN2W + H]
        ln2_b = bias_ref[l, :, O_LN2B:O_LN2B + H]
        b1    = bias_ref[l, :, O_B1:O_B1 + M]
        b2    = bias_ref[l, :, O_B2:O_B2 + H]

        # ---- multi-head self-attention (pre-LN), fused QKV projection ----
        h = _layernorm(x, ln1_w, ln1_b)
        qkv = jnp.dot(h, wA_ref[l, :, O_WQKV:O_WQKV + 3 * H],
                      preferred_element_type=jnp.float32) + bqkv          # (BS_PAD, 3H)
        q = qkv[:, 0:H]
        k = qkv[:, H:2 * H]
        v = qkv[:, 2 * H:3 * H]

        # accumulate per-head outputs through row slices of Wo (no lane concat)
        o = jnp.zeros((BS_PAD, H), jnp.float32)
        for hh in range(NH):                                    # static unroll over heads
            sl = slice(hh * HD, (hh + 1) * HD)
            sc = jax.lax.dot_general(q[:, sl], k[:, sl],
                                     (((1,), (1,)), ((), ())),
                                     preferred_element_type=jnp.float32)
            sc = sc * scale + amask
            sc = sc - jnp.max(sc, axis=-1, keepdims=True)
            pr = jnp.exp(sc)
            pr = pr / jnp.sum(pr, axis=-1, keepdims=True)       # exact divide
            pv = jnp.dot(pr, v[:, sl], preferred_element_type=jnp.float32)   # (BS_PAD, HD)
            o = o + jnp.dot(pv, wA_ref[l, sl, O_WO:O_WO + H],
                            preferred_element_type=jnp.float32)              # (BS_PAD, H)
        x = x + o + bo

        # ---- MLP block (pre-LN), exact-erf GELU ----
        h2 = _layernorm(x, ln2_w, ln2_b)
        m = jnp.dot(h2, wA_ref[l, :, O_W1:O_W1 + M],
                    preferred_element_type=jnp.float32) + b1
        m = _gelu_exact(m)
        x = x + jnp.dot(m, w2_ref[l], preferred_element_type=jnp.float32) + b2

    # ---- final LayerNorm + classifier (all rows; CLS rows gathered in the wrapper,
    #      keeping the kernel output lane-dense) ----
    xn = _layernorm(x, lnf_w, lnf_b)
    out_ref[...] = (jnp.dot(xn, head_ref[0:H, :], preferred_element_type=jnp.float32)
                    + head_ref[H:H + 1, :])


# ---------------- One-time parameter packing (hoisted out of the forward) ----------------
def pack_params(params, b=B):
    assert b * S <= BS_PAD
    # fold CLS token + conv bias into the positional-embedding constant, tile over batch
    pos_eff = params["pos"].at[0].add(params["cls"][0])
    pos_eff = pos_eff.at[1:].add(params["b_pe"])                           # (S, H)
    pos_tiled = jnp.zeros((BS_PAD, H), jnp.float32)
    pos_tiled = pos_tiled.at[:b * S].set(jnp.tile(pos_eff, (b, 1)))        # (BS_PAD, H)

    misc = jnp.zeros((MISC_ROWS, H), jnp.float32)
    misc = misc.at[R_WPE:R_WPE + DP, :].set(params["w_pe"])
    misc = misc.at[R_POS:R_POS + BS_PAD, :].set(pos_tiled)
    misc = misc.at[R_LNFW, :].set(params["lnf_w"][0])
    misc = misc.at[R_LNFB, :].set(params["lnf_b"][0])

    wA = jnp.concatenate([params["wq"], params["wk"], params["wv"],
                          params["wo"], params["w1"]], axis=-1)            # (L, H, 4H+M)
    bias = jnp.concatenate([params["ln1_w"], params["ln1_b"],
                            params["bq"], params["bk"], params["bv"],
                            params["bo"], params["ln2_w"], params["ln2_b"],
                            params["b1"], params["b2"]], axis=-1)          # (L, 1, BIAS_W)

    head = jnp.zeros((H + 8, LANE), jnp.float32)
    head = head.at[0:H, 0:NCLS].set(params["wc"])
    head = head.at[H, 0:NCLS].set(params["bc"][0])

    return {"misc": misc, "wA": wA, "w2": params["w2"], "bias": bias, "head": head}


# ---------------- Wrapper / glue ----------------
def _extract_patches(x):
    """x: (b, C, IMG, IMG) NCHW -> (b, N, C*P*P), row-major over patch grid."""
    b = x.shape[0]
    xp = x.reshape(b, C, IMG // P, P, IMG // P, P)
    xp = xp.transpose(0, 2, 4, 1, 3, 5)                 # (b, gh, gw, C, P, P)
    return xp.reshape(b, N, DP)


def _cost_estimate():
    per_layer = (2 * BS_PAD * H * (3 * H)                                   # fused QKV
                 + NH * (2 * BS_PAD * BS_PAD * HD * 2 + 2 * BS_PAD * HD * H)  # attn + Wo
                 + 2 * 2 * BS_PAD * H * M)                                  # MLP
    flops = 2 * BS_PAD * DP * H + L * per_layer + 2 * BS_PAD * H * LANE
    transcendentals = L * (NH * BS_PAD * BS_PAD + BS_PAD * M)
    bytes_accessed = 4 * (BS_PAD * DP + MISC_ROWS * H + L * H * WA_W
                          + L * M * H + L * BIAS_W + (H + 8) * LANE + BS_PAD * LANE)
    return pl.CostEstimate(flops=flops, transcendentals=transcendentals,
                           bytes_accessed=bytes_accessed)


_VMEM_SPEC = pl.BlockSpec(memory_space=pltpu.MemorySpace.VMEM)


@jax.jit
def vit_wrapper_forward(x, packed):
    b = x.shape[0]
    patches = _extract_patches(x)                                          # (b, N, DP)
    tok = jnp.concatenate([jnp.zeros((b, 1, DP), jnp.float32), patches],
                          axis=1).reshape(b * S, DP)                       # (BS, DP)
    tok = jnp.zeros((BS_PAD, DP), jnp.float32).at[:b * S].set(tok)         # (BS_PAD, DP)

    out = pl.pallas_call(
        vit_kernel,
        out_shape=jax.ShapeDtypeStruct((BS_PAD, LANE), jnp.float32),
        in_specs=[_VMEM_SPEC] * 6,
        out_specs=_VMEM_SPEC,
        cost_estimate=_cost_estimate(),
    )(tok, packed["misc"], packed["wA"], packed["w2"], packed["bias"], packed["head"])

    # gather the CLS row of each batch element and drop the lane padding
    return out[:b * S].reshape(b, S, LANE)[:, 0, :NCLS]                    # (b, NCLS)


# ---------------- Pure-JAX reference (same math, exact-erf GELU) ----------------
def vit_reference(x, params):
    def one(xi):
        patches = _extract_patches(xi[None])[0]                      # (N, DP)
        pe = patches @ params["w_pe"] + params["b_pe"]               # (N, H)
        xx = jnp.concatenate([params["cls"], pe], axis=0) + params["pos"]
        scale = 1.0 / np.sqrt(HD)
        for l in range(L):
            h = _layernorm(xx, params["ln1_w"][l], params["ln1_b"][l])
            q = h @ params["wq"][l] + params["bq"][l]
            k = h @ params["wk"][l] + params["bk"][l]
            v = h @ params["wv"][l] + params["bv"][l]
            heads = []
            for hh in range(NH):
                qs, ks, vs = (t[:, hh * HD:(hh + 1) * HD] for t in (q, k, v))
                pr = jax.nn.softmax(qs @ ks.T * scale, axis=-1)
                heads.append(pr @ vs)
            attn = jnp.concatenate(heads, axis=-1) @ params["wo"][l] + params["bo"][l]
            xx = xx + attn
            h2 = _layernorm(xx, params["ln2_w"][l], params["ln2_b"][l])
            m = jax.nn.gelu(h2 @ params["w1"][l] + params["b1"][l], approximate=False)
            xx = xx + m @ params["w2"][l] + params["b2"][l]
        xx = _layernorm(xx, params["lnf_w"], params["lnf_b"])
        return (xx[0:1] @ params["wc"] + params["bc"])[0]
    return jnp.stack([one(x[i]) for i in range(x.shape[0])])


# ---------------- Deterministic parameter init ----------------
def init_params(key):
    ks = jax.random.split(key, 24)
    std = 0.02
    nrm = lambda k, shp: (std * jax.random.normal(k, shp)).astype(jnp.float32)
    w_conv = nrm(ks[0], (H, C, P, P))                    # Conv2d weight (out, in, P, P)
    return {
        "w_pe":  w_conv.reshape(H, DP).T,                # (DP, H)
        "b_pe":  jnp.zeros((H,), jnp.float32),
        "cls":   nrm(ks[1], (1, H)),
        "pos":   nrm(ks[2], (S, H)),
        "ln1_w": jnp.ones((L, 1, H), jnp.float32),
        "ln1_b": jnp.zeros((L, 1, H), jnp.float32),
        "wq":    nrm(ks[3], (L, H, H)), "bq": jnp.zeros((L, 1, H), jnp.float32),
        "wk":    nrm(ks[4], (L, H, H)), "bk": jnp.zeros((L, 1, H), jnp.float32),
        "wv":    nrm(ks[5], (L, H, H)), "bv": jnp.zeros((L, 1, H), jnp.float32),
        "wo":    nrm(ks[6], (L, H, H)), "bo": jnp.zeros((L, 1, H), jnp.float32),
        "ln2_w": jnp.ones((L, 1, H), jnp.float32),
        "ln2_b": jnp.zeros((L, 1, H), jnp.float32),
        "w1":    nrm(ks[7], (L, H, M)), "b1": jnp.zeros((L, 1, M), jnp.float32),
        "w2":    nrm(ks[8], (L, M, H)), "b2": jnp.zeros((L, 1, H), jnp.float32),
        "lnf_w": jnp.ones((1, H), jnp.float32),
        "lnf_b": jnp.zeros((1, H), jnp.float32),
        "wc":    nrm(ks[9], (H, NCLS)),
        "bc":    jnp.zeros((1, NCLS), jnp.float32),
    }


if __name__ == "__main__":
    key = jax.random.PRNGKey(0)
    pkey, xkey = jax.random.split(key)
    params = init_params(pkey)
    packed = pack_params(params)          # one-time slab packing, not part of the forward
    x = jax.random.normal(xkey, (B, C, IMG, IMG), dtype=jnp.float32)   # NCHW

    logits = jax.block_until_ready(vit_wrapper_forward(x, packed))
    ref = jax.block_until_ready(vit_reference(x, params))

    assert logits.shape == (B, NCLS)
    # exact softmax divide + erf-GELU (<=1.5e-7 poly error): agreement is ~1e-6; 1e-4 is a
    # comfortable margin for fp32 op-reordering between the fused kernel and the reference.
    np.testing.assert_allclose(np.asarray(logits), np.asarray(ref), rtol=1e-4, atol=1e-4)
    print("KERNEL_OK")
</pallas_src>

<mosaic_0001>
module attributes {stable_mosaic.version = 11 : i64} {
  func.func @vit_kernel(%arg0: memref<16x192xf32, #tpu.memory_space<vmem>>, %arg1: memref<224x32xf32, #tpu.memory_space<vmem>>, %arg2: memref<2x32x192xf32, #tpu.memory_space<vmem>>, %arg3: memref<2x64x32xf32, #tpu.memory_space<vmem>>, %arg4: memref<2x1x352xf32, #tpu.memory_space<vmem>>, %arg5: memref<40x128xf32, #tpu.memory_space<vmem>>, %arg6: memref<16x128xf32, #tpu.memory_space<vmem>>) attributes {dimension_semantics = [], scalar_prefetch = 0 : i64, scratch_operands = 0 : i64, tpu.core_type = #tpu.core_type<tc>} {
    %c0 = arith.constant 0 : index
    %c0_0 = arith.constant 0 : index
    %0 = vector.load %arg1[%c0, %c0_0] : memref<224x32xf32, #tpu.memory_space<vmem>>, vector<192x32xf32>
    %c192 = arith.constant 192 : index
    %c0_1 = arith.constant 0 : index
    %1 = vector.load %arg1[%c192, %c0_1] : memref<224x32xf32, #tpu.memory_space<vmem>>, vector<16x32xf32>
    %c208 = arith.constant 208 : index
    %c0_2 = arith.constant 0 : index
    %2 = vector.load %arg1[%c208, %c0_2] : memref<224x32xf32, #tpu.memory_space<vmem>>, vector<1x32xf32>
    %c216 = arith.constant 216 : index
    %c0_3 = arith.constant 0 : index
    %3 = vector.load %arg1[%c216, %c0_3] : memref<224x32xf32, #tpu.memory_space<vmem>>, vector<1x32xf32>
    %4 = tpu.iota {dimensions = array<i32: 0>} : vector<16x16xi32>
    %5 = tpu.iota {dimensions = array<i32: 1>} : vector<16x16xi32>
    %c5_i32 = arith.constant 5 : i32
    %6 = vector.broadcast %c5_i32 : i32 to vector<16x16xi32>
    %7 = arith.cmpi sge, %4, %6 : vector<16x16xi32>
    %c5_i32_4 = arith.constant 5 : i32
    %8 = vector.broadcast %c5_i32_4 : i32 to vector<16x16xi32>
    %9 = arith.cmpi sge, %5, %8 : vector<16x16xi32>
    %10 = arith.xori %7, %9 : vector<16x16xi1>
    %cst = arith.constant dense<true> : vector<16x16xi1>
    %11 = arith.xori %10, %cst : vector<16x16xi1>
    %c10_i32 = arith.constant 10 : i32
    %12 = vector.broadcast %c10_i32 : i32 to vector<16x16xi32>
    %13 = arith.cmpi sge, %4, %12 : vector<16x16xi32>
    %c10_i32_5 = arith.constant 10 : i32
    %14 = vector.broadcast %c10_i32_5 : i32 to vector<16x16xi32>
    %15 = arith.cmpi sge, %5, %14 : vector<16x16xi32>
    %16 = arith.xori %13, %15 : vector<16x16xi1>
    %cst_6 = arith.constant dense<true> : vector<16x16xi1>
    %17 = arith.xori %16, %cst_6 : vector<16x16xi1>
    %18 = arith.andi %11, %17 : vector<16x16xi1>
    %c15_i32 = arith.constant 15 : i32
    %19 = vector.broadcast %c15_i32 : i32 to vector<16x16xi32>
    %20 = arith.cmpi sge, %4, %19 : vector<16x16xi32>
    %c15_i32_7 = arith.constant 15 : i32
    %21 = vector.broadcast %c15_i32_7 : i32 to vector<16x16xi32>
    %22 = arith.cmpi sge, %5, %21 : vector<16x16xi32>
    %23 = arith.xori %20, %22 : vector<16x16xi1>
    %cst_8 = arith.constant dense<true> : vector<16x16xi1>
    %24 = arith.xori %23, %cst_8 : vector<16x16xi1>
    %25 = arith.andi %18, %24 : vector<16x16xi1>
    %cst_9 = arith.constant 0.000000e+00 : f32
    %cst_10 = arith.constant -1.000000e+30 : f32
    %26 = vector.broadcast %cst_9 : f32 to vector<16x16xf32>
    %27 = vector.broadcast %cst_10 : f32 to vector<16x16xf32>
    %28 = arith.select %25, %26, %27 : vector<16x16xi1>, vector<16x16xf32>
    %c0_11 = arith.constant 0 : index
    %c0_12 = arith.constant 0 : index
    %29 = vector.load %arg0[%c0_11, %c0_12] : memref<16x192xf32, #tpu.memory_space<vmem>>, vector<16x192xf32>
    %cst_13 = arith.constant dense<0.000000e+00> : vector<16x32xf32>
    %30 = tpu.matmul %29, %0, %cst_13 {dimension_numbers = #tpu.dot_dimension_numbers<[1], [0], [0], [1], [0, 0, 1, 1], [], []>} : vector<16x192xf32>, vector<192x32xf32>, vector<16x32xf32> -> vector<16x32xf32>
    %31 = arith.addf %30, %1 : vector<16x32xf32>
    %c0_14 = arith.constant 0 : index
    %c0_15 = arith.constant 0 : index
    %c0_16 = arith.constant 0 : index
    %32 = vector.load %arg4[%c0_14, %c0_15, %c0_16] : memref<2x1x352xf32, #tpu.memory_space<vmem>>, vector<1x1x32xf32>
    %33 = vector.shape_cast %32 : vector<1x1x32xf32> to vector<1x32xf32>
    %c0_17 = arith.constant 0 : index
    %c0_18 = arith.constant 0 : index
    %c32 = arith.constant 32 : index
    %34 = vector.load %arg4[%c0_17, %c0_18, %c32] : memref<2x1x352xf32, #tpu.memory_space<vmem>>, vector<1x1x32xf32>
    %35 = vector.shape_cast %34 : vector<1x1x32xf32> to vector<1x32xf32>
    %c0_19 = arith.constant 0 : index
    %c0_20 = arith.constant 0 : index
    %c64 = arith.constant 64 : index
    %36 = vector.load %arg4[%c0_19, %c0_20, %c64] : memref<2x1x352xf32, #tpu.memory_space<vmem>>, vector<1x1x96xf32>
    %37 = vector.shape_cast %36 : vector<1x1x96xf32> to vector<1x96xf32>
    %c0_21 = arith.constant 0 : index
    %c0_22 = arith.constant 0 : index
    %c160 = arith.constant 160 : index
    %38 = vector.load %arg4[%c0_21, %c0_22, %c160] : memref<2x1x352xf32, #tpu.memory_space<vmem>>, vector<1x1x32xf32>
    %39 = vector.shape_cast %38 : vector<1x1x32xf32> to vector<1x32xf32>
    %c0_23 = arith.constant 0 : index
    %c0_24 = arith.constant 0 : index
    %c192_25 = arith.constant 192 : index
    %40 = vector.load %arg4[%c0_23, %c0_24, %c192_25] : memref<2x1x352xf32, #tpu.memory_space<vmem>>, vector<1x1x32xf32>
    %41 = vector.shape_cast %40 : vector<1x1x32xf32> to vector<1x32xf32>
    %c0_26 = arith.constant 0 : index
    %c0_27 = arith.constant 0 : index
    %c224 = arith.constant 224 : index
    %42 = vector.load %arg4[%c0_26, %c0_27, %c224] : memref<2x1x352xf32, #tpu.memory_space<vmem>>, vector<1x1x32xf32>
    %43 = vector.shape_cast %42 : vector<1x1x32xf32> to vector<1x32xf32>
    %c0_28 = arith.constant 0 : index
    %c0_29 = arith.constant 0 : index
    %c256 = arith.constant 256 : index
    %44 = vector.load %arg4[%c0_28, %c0_29, %c256] : memref<2x1x352xf32, #tpu.memory_space<vmem>>, vector<1x1x64xf32>
    %45 = vector.shape_cast %44 : vector<1x1x64xf32> to vector<1x64xf32>
    %c0_30 = arith.constant 0 : index
    %c0_31 = arith.constant 0 : index
    %c320 = arith.constant 320 : index
    %46 = vector.load %arg4[%c0_30, %c0_31, %c320] : memref<2x1x352xf32, #tpu.memory_space<vmem>>, vector<1x1x32xf32>
    %47 = vector.shape_cast %46 : vector<1x1x32xf32> to vector<1x32xf32>
    %cst_32 = arith.constant dense<0.000000e+00> : vector<16xf32>
    %48 = vector.multi_reduction <add>, %31, %cst_32 [1] : vector<16x32xf32> to vector<16xf32>
    %49 = vector.shape_cast %48 : vector<16xf32> to vector<16x1xf32>
    %cst_33 = arith.constant 3.200000e+01 : f32
    %50 = vector.broadcast %cst_33 : f32 to vector<16x1xf32>
    %51 = arith.divf %49, %50 : vector<16x1xf32>
    %52 = vector.broadcast %51 : vector<16x1xf32> to vector<16x32xf32>
    %53 = arith.subf %31, %52 : vector<16x32xf32>
    %54 = arith.mulf %53, %53 : vector<16x32xf32>
    %cst_34 = arith.constant dense<0.000000e+00> : vector<16xf32>
    %55 = vector.multi_reduction <add>, %54, %cst_34 [1] : vector<16x32xf32> to vector<16xf32>
    %56 = vector.shape_cast %55 : vector<16xf32> to vector<16x1xf32>
    %cst_35 = arith.constant 3.200000e+01 : f32
    %57 = vector.broadcast %cst_35 : f32 to vector<16x1xf32>
    %58 = arith.divf %56, %57 : vector<16x1xf32>
    %59 = vector.broadcast %51 : vector<16x1xf32> to vector<16x32xf32>
    %60 = arith.subf %31, %59 : vector<16x32xf32>
    %cst_36 = arith.constant 9.99999996E-13 : f32
    %61 = vector.broadcast %cst_36 : f32 to vector<16x1xf32>
    %62 = arith.addf %58, %61 : vector<16x1xf32>
    %63 = math.rsqrt %62 : vector<16x1xf32>
    %64 = vector.broadcast %63 : vector<16x1xf32> to vector<16x32xf32>
    %65 = arith.mulf %60, %64 : vector<16x32xf32>
    %66 = vector.broadcast %33 : vector<1x32xf32> to vector<16x32xf32>
    %67 = arith.mulf %65, %66 : vector<16x32xf32>
    %68 = vector.broadcast %35 : vector<1x32xf32> to vector<16x32xf32>
    %69 = arith.addf %67, %68 : vector<16x32xf32>
    %c0_37 = arith.constant 0 : index
    %c0_38 = arith.constant 0 : index
    %c0_39 = arith.constant 0 : index
    %70 = vector.load %arg2[%c0_37, %c0_38, %c0_39] : memref<2x32x192xf32, #tpu.memory_space<vmem>>, vector<1x32x96xf32>
    %71 = vector.shape_cast %70 : vector<1x32x96xf32> to vector<32x96xf32>
    %cst_40 = arith.constant dense<0.000000e+00> : vector<16x96xf32>
    %72 = tpu.matmul %69, %71, %cst_40 {dimension_numbers = #tpu.dot_dimension_numbers<[1], [0], [0], [1], [0, 0, 1, 1], [], []>} : vector<16x32xf32>, vector<32x96xf32>, vector<16x96xf32> -> vector<16x96xf32>
    %73 = vector.broadcast %37 : vector<1x96xf32> to vector<16x96xf32>
    %74 = arith.addf %72, %73 : vector<16x96xf32>
    %75 = vector.extract_strided_slice %74 {offsets = [0, 0], sizes = [16, 32], strides = [1, 1]} : vector<16x96xf32> to vector<16x32xf32>
    %76 = vector.extract_strided_slice %74 {offsets = [0, 32], sizes = [16, 32], strides = [1, 1]} : vector<16x96xf32> to vector<16x32xf32>
    %77 = vector.extract_strided_slice %74 {offsets = [0, 64], sizes = [16, 32], strides = [1, 1]} : vector<16x96xf32> to vector<16x32xf32>
    %cst_41 = arith.constant 0.000000e+00 : f32
    %78 = vector.broadcast %cst_41 : f32 to vector<16x32xf32>
    %79 = vector.extract_strided_slice %75 {offsets = [0, 0], sizes = [16, 16], strides = [1, 1]} : vector<16x32xf32> to vector<16x16xf32>
    %80 = vector.extract_strided_slice %76 {offsets = [0, 0], sizes = [16, 16], strides = [1, 1]} : vector<16x32xf32> to vector<16x16xf32>
    %cst_42 = arith.constant dense<0.000000e+00> : vector<16x16xf32>
    %81 = tpu.matmul %79, %80, %cst_42 {dimension_numbers = #tpu.dot_dimension_numbers<[1], [1], [0], [0], [0, 0, 1, 0], [], []>} : vector<16x16xf32>, vector<16x16xf32>, vector<16x16xf32> -> vector<16x16xf32>
    %cst_43 = arith.constant 2.500000e-01 : f32
    %82 = vector.broadcast %cst_43 : f32 to vector<16x16xf32>
    %83 = arith.mulf %81, %82 : vector<16x16xf32>
    %84 = arith.addf %83, %28 : vector<16x16xf32>
    %cst_44 = arith.constant dense<0xFF800000> : vector<16xf32>
    %85 = vector.multi_reduction <maximumf>, %84, %cst_44 [1] : vector<16x16xf32> to vector<16xf32>
    %86 = vector.shape_cast %85 : vector<16xf32> to vector<16x1xf32>
    %87 = vector.broadcast %86 : vector<16x1xf32> to vector<16x16xf32>
    %88 = arith.subf %84, %87 : vector<16x16xf32>
    %89 = math.exp %88 : vector<16x16xf32>
    %cst_45 = arith.constant dense<0.000000e+00> : vector<16xf32>
    %90 = vector.multi_reduction <add>, %89, %cst_45 [1] : vector<16x16xf32> to vector<16xf32>
    %91 = vector.shape_cast %90 : vector<16xf32> to vector<16x1xf32>
    %92 = vector.broadcast %91 : vector<16x1xf32> to vector<16x16xf32>
    %93 = arith.divf %89, %92 : vector<16x16xf32>
    %94 = vector.extract_strided_slice %77 {offsets = [0, 0], sizes = [16, 16], strides = [1, 1]} : vector<16x32xf32> to vector<16x16xf32>
    %cst_46 = arith.constant dense<0.000000e+00> : vector<16x16xf32>
    %95 = tpu.matmul %93, %94, %cst_46 {dimension_numbers = #tpu.dot_dimension_numbers<[1], [0], [0], [1], [0, 0, 1, 1], [], []>} : vector<16x16xf32>, vector<16x16xf32>, vector<16x16xf32> -> vector<16x16xf32>
    %c0_47 = arith.constant 0 : index
    %c0_48 = arith.constant 0 : index
    %c96 = arith.constant 96 : index
    %96 = vector.load %arg2[%c0_47, %c0_48, %c96] : memref<2x32x192xf32, #tpu.memory_space<vmem>>, vector<1x16x32xf32>
    %97 = vector.shape_cast %96 : vector<1x16x32xf32> to vector<16x32xf32>
    %cst_49 = arith.constant dense<0.000000e+00> : vector<16x32xf32>
    %98 = tpu.matmul %95, %97, %cst_49 {dimension_numbers = #tpu.dot_dimension_numbers<[1], [0], [0], [1], [0, 0, 1, 1], [], []>} : vector<16x16xf32>, vector<16x32xf32>, vector<16x32xf32> -> vector<16x32xf32>
    %99 = arith.addf %78, %98 : vector<16x32xf32>
    %100 = vector.extract_strided_slice %75 {offsets = [0, 16], sizes = [16, 16], strides = [1, 1]} : vector<16x32xf32> to vector<16x16xf32>
    %101 = vector.extract_strided_slice %76 {offsets = [0, 16], sizes = [16, 16], strides = [1, 1]} : vector<16x32xf32> to vector<16x16xf32>
    %cst_50 = arith.constant dense<0.000000e+00> : vector<16x16xf32>
    %102 = tpu.matmul %100, %101, %cst_50 {dimension_numbers = #tpu.dot_dimension_numbers<[1], [1], [0], [0], [0, 0, 1, 0], [], []>} : vector<16x16xf32>, vector<16x16xf32>, vector<16x16xf32> -> vector<16x16xf32>
    %cst_51 = arith.constant 2.500000e-01 : f32
    %103 = vector.broadcast %cst_51 : f32 to vector<16x16xf32>
    %104 = arith.mulf %102, %103 : vector<16x16xf32>
    %105 = arith.addf %104, %28 : vector<16x16xf32>
    %cst_52 = arith.constant dense<0xFF800000> : vector<16xf32>
    %106 = vector.multi_reduction <maximumf>, %105, %cst_52 [1] : vector<16x16xf32> to vector<16xf32>
    %107 = vector.shape_cast %106 : vector<16xf32> to vector<16x1xf32>
    %108 = vector.broadcast %107 : vector<16x1xf32> to vector<16x16xf32>
    %109 = arith.subf %105, %108 : vector<16x16xf32>
    %110 = math.exp %109 : vector<16x16xf32>
    %cst_53 = arith.constant dense<0.000000e+00> : vector<16xf32>
    %111 = vector.multi_reduction <add>, %110, %cst_53 [1] : vector<16x16xf32> to vector<16xf32>
    %112 = vector.shape_cast %111 : vector<16xf32> to vector<16x1xf32>
    %113 = vector.broadcast %112 : vector<16x1xf32> to vector<16x16xf32>
    %114 = arith.divf %110, %113 : vector<16x16xf32>
    %115 = vector.extract_strided_slice %77 {offsets = [0, 16], sizes = [16, 16], strides = [1, 1]} : vector<16x32xf32> to vector<16x16xf32>
    %cst_54 = arith.constant dense<0.000000e+00> : vector<16x16xf32>
    %116 = tpu.matmul %114, %115, %cst_54 {dimension_numbers = #tpu.dot_dimension_numbers<[1], [0], [0], [1], [0, 0, 1, 1], [], []>} : vector<16x16xf32>, vector<16x16xf32>, vector<16x16xf32> -> vector<16x16xf32>
    %c0_55 = arith.constant 0 : index
    %c16 = arith.constant 16 : index
    %c96_56 = arith.constant 96 : index
    %117 = vector.load %arg2[%c0_55, %c16, %c96_56] : memref<2x32x192xf32, #tpu.memory_space<vmem>>, vector<1x16x32xf32>
    %118 = vector.shape_cast %117 : vector<1x16x32xf32> to vector<16x32xf32>
    %cst_57 = arith.constant dense<0.000000e+00> : vector<16x32xf32>
    %119 = tpu.matmul %116, %118, %cst_57 {dimension_numbers = #tpu.dot_dimension_numbers<[1], [0], [0], [1], [0, 0, 1, 1], [], []>} : vector<16x16xf32>, vector<16x32xf32>, vector<16x32xf32> -> vector<16x32xf32>
    %120 = arith.addf %99, %119 : vector<16x32xf32>
    %121 = arith.addf %31, %120 : vector<16x32xf32>
    %122 = vector.broadcast %39 : vector<1x32xf32> to vector<16x32xf32>
    %123 = arith.addf %121, %122 : vector<16x32xf32>
    %cst_58 = arith.constant dense<0.000000e+00> : vector<16xf32>
    %124 = vector.multi_reduction <add>, %123, %cst_58 [1] : vector<16x32xf32> to vector<16xf32>
    %125 = vector.shape_cast %124 : vector<16xf32> to vector<16x1xf32>
    %cst_59 = arith.constant 3.200000e+01 : f32
    %126 = vector.broadcast %cst_59 : f32 to vector<16x1xf32>
    %127 = arith.divf %125, %126 : vector<16x1xf32>
    %128 = vector.broadcast %127 : vector<16x1xf32> to vector<16x32xf32>
    %129 = arith.subf %123, %128 : vector<16x32xf32>
    %130 = arith.mulf %129, %129 : vector<16x32xf32>
    %cst_60 = arith.constant dense<0.000000e+00> : vector<16xf32>
    %131 = vector.multi_reduction <add>, %130, %cst_60 [1] : vector<16x32xf32> to vector<16xf32>
    %132 = vector.shape_cast %131 : vector<16xf32> to vector<16x1xf32>
    %cst_61 = arith.constant 3.200000e+01 : f32
    %133 = vector.broadcast %cst_61 : f32 to vector<16x1xf32>
    %134 = arith.divf %132, %133 : vector<16x1xf32>
    %135 = vector.broadcast %127 : vector<16x1xf32> to vector<16x32xf32>
    %136 = arith.subf %123, %135 : vector<16x32xf32>
    %cst_62 = arith.constant 9.99999996E-13 : f32
    %137 = vector.broadcast %cst_62 : f32 to vector<16x1xf32>
    %138 = arith.addf %134, %137 : vector<16x1xf32>
    %139 = math.rsqrt %138 : vector<16x1xf32>
    %140 = vector.broadcast %139 : vector<16x1xf32> to vector<16x32xf32>
    %141 = arith.mulf %136, %140 : vector<16x32xf32>
    %142 = vector.broadcast %41 : vector<1x32xf32> to vector<16x32xf32>
    %143 = arith.mulf %141, %142 : vector<16x32xf32>
    %144 = vector.broadcast %43 : vector<1x32xf32> to vector<16x32xf32>
    %145 = arith.addf %143, %144 : vector<16x32xf32>
    %c0_63 = arith.constant 0 : index
    %c0_64 = arith.constant 0 : index
    %c128 = arith.constant 128 : index
    %146 = vector.load %arg2[%c0_63, %c0_64, %c128] : memref<2x32x192xf32, #tpu.memory_space<vmem>>, vector<1x32x64xf32>
    %147 = vector.shape_cast %146 : vector<1x32x64xf32> to vector<32x64xf32>
    %cst_65 = arith.constant dense<0.000000e+00> : vector<16x64xf32>
    %148 = tpu.matmul %145, %147, %cst_65 {dimension_numbers = #tpu.dot_dimension_numbers<[1], [0], [0], [1], [0, 0, 1, 1], [], []>} : vector<16x32xf32>, vector<32x64xf32>, vector<16x64xf32> -> vector<16x64xf32>
    %149 = vector.broadcast %45 : vector<1x64xf32> to vector<16x64xf32>
    %150 = arith.addf %148, %149 : vector<16x64xf32>
    %cst_66 = arith.constant 5.000000e-01 : f32
    %151 = vector.broadcast %cst_66 : f32 to vector<16x64xf32>
    %152 = arith.mulf %151, %150 : vector<16x64xf32>
    %cst_67 = arith.constant 0.707106769 : f32
    %153 = vector.broadcast %cst_67 : f32 to vector<16x64xf32>
    %154 = arith.mulf %150, %153 : vector<16x64xf32>
    %155 = math.absf %154 : vector<16x64xf32>
    %cst_68 = arith.constant 0.327591091 : f32
    %156 = vector.broadcast %cst_68 : f32 to vector<16x64xf32>
    %157 = arith.mulf %156, %155 : vector<16x64xf32>
    %cst_69 = arith.constant 1.000000e+00 : f32
    %158 = vector.broadcast %cst_69 : f32 to vector<16x64xf32>
    %159 = arith.addf %158, %157 : vector<16x64xf32>
    %cst_70 = arith.constant 1.000000e+00 : f32
    %160 = vector.broadcast %cst_70 : f32 to vector<16x64xf32>
    %161 = arith.divf %160, %159 : vector<16x64xf32>
    %cst_71 = arith.constant 1.06140542 : f32
    %162 = vector.broadcast %cst_71 : f32 to vector<16x64xf32>
    %163 = arith.mulf %161, %162 : vector<16x64xf32>
    %cst_72 = arith.constant -1.45315206 : f32
    %164 = vector.broadcast %cst_72 : f32 to vector<16x64xf32>
    %165 = arith.addf %164, %163 : vector<16x64xf32>
    %166 = arith.mulf %161, %165 : vector<16x64xf32>
    %cst_73 = arith.constant 1.42141378 : f32
    %167 = vector.broadcast %cst_73 : f32 to vector<16x64xf32>
    %168 = arith.addf %167, %166 : vector<16x64xf32>
    %169 = arith.mulf %161, %168 : vector<16x64xf32>
    %cst_74 = arith.constant -0.284496725 : f32
    %170 = vector.broadcast %cst_74 : f32 to vector<16x64xf32>
    %171 = arith.addf %170, %169 : vector<16x64xf32>
    %172 = arith.mulf %161, %171 : vector<16x64xf32>
    %cst_75 = arith.constant 0.254829586 : f32
    %173 = vector.broadcast %cst_75 : f32 to vector<16x64xf32>
    %174 = arith.addf %173, %172 : vector<16x64xf32>
    %175 = arith.mulf %161, %174 : vector<16x64xf32>
    %cst_76 = arith.constant 0.000000e+00 : f32
    %176 = vector.broadcast %cst_76 : f32 to vector<16x64xf32>
    %177 = arith.subf %176, %155 : vector<16x64xf32>
    %178 = arith.mulf %177, %155 : vector<16x64xf32>
    %179 = math.exp %178 : vector<16x64xf32>
    %180 = arith.mulf %175, %179 : vector<16x64xf32>
    %cst_77 = arith.constant 1.000000e+00 : f32
    %181 = vector.broadcast %cst_77 : f32 to vector<16x64xf32>
    %182 = arith.subf %181, %180 : vector<16x64xf32>
    %cst_78 = arith.constant 0.000000e+00 : f32
    %183 = vector.broadcast %cst_78 : f32 to vector<16x64xf32>
    %184 = arith.cmpf olt, %154, %183 : vector<16x64xf32>
    %cst_79 = arith.constant 0.000000e+00 : f32
    %185 = vector.broadcast %cst_79 : f32 to vector<16x64xf32>
    %186 = arith.subf %185, %182 : vector<16x64xf32>
    %187 = arith.select %184, %186, %182 : vector<16x64xi1>, vector<16x64xf32>
    %cst_80 = arith.constant 1.000000e+00 : f32
    %188 = vector.broadcast %cst_80 : f32 to vector<16x64xf32>
    %189 = arith.addf %188, %187 : vector<16x64xf32>
    %190 = arith.mulf %152, %189 : vector<16x64xf32>
    %c0_81 = arith.constant 0 : index
    %c0_82 = arith.constant 0 : index
    %c0_83 = arith.constant 0 : index
    %191 = vector.load %arg3[%c0_81, %c0_82, %c0_83] : memref<2x64x32xf32, #tpu.memory_space<vmem>>, vector<1x64x32xf32>
    %192 = vector.shape_cast %191 : vector<1x64x32xf32> to vector<64x32xf32>
    %cst_84 = arith.constant dense<0.000000e+00> : vector<16x32xf32>
    %193 = tpu.matmul %190, %192, %cst_84 {dimension_numbers = #tpu.dot_dimension_numbers<[1], [0], [0], [1], [0, 0, 1, 1], [], []>} : vector<16x64xf32>, vector<64x32xf32>, vector<16x32xf32> -> vector<16x32xf32>
    %194 = arith.addf %123, %193 : vector<16x32xf32>
    %195 = vector.broadcast %47 : vector<1x32xf32> to vector<16x32xf32>
    %196 = arith.addf %194, %195 : vector<16x32xf32>
    %c1 = arith.constant 1 : index
    %c0_85 = arith.constant 0 : index
    %c0_86 = arith.constant 0 : index
    %197 = vector.load %arg4[%c1, %c0_85, %c0_86] : memref<2x1x352xf32, #tpu.memory_space<vmem>>, vector<1x1x32xf32>
    %198 = vector.shape_cast %197 : vector<1x1x32xf32> to vector<1x32xf32>
    %c1_87 = arith.constant 1 : index
    %c0_88 = arith.constant 0 : index
    %c32_89 = arith.constant 32 : index
    %199 = vector.load %arg4[%c1_87, %c0_88, %c32_89] : memref<2x1x352xf32, #tpu.memory_space<vmem>>, vector<1x1x32xf32>
    %200 = vector.shape_cast %199 : vector<1x1x32xf32> to vector<1x32xf32>
    %c1_90 = arith.constant 1 : index
    %c0_91 = arith.constant 0 : index
    %c64_92 = arith.constant 64 : index
    %201 = vector.load %arg4[%c1_90, %c0_91, %c64_92] : memref<2x1x352xf32, #tpu.memory_space<vmem>>, vector<1x1x96xf32>
    %202 = vector.shape_cast %201 : vector<1x1x96xf32> to vector<1x96xf32>
    %c1_93 = arith.constant 1 : index
    %c0_94 = arith.constant 0 : index
    %c160_95 = arith.constant 160 : index
    %203 = vector.load %arg4[%c1_93, %c0_94, %c160_95] : memref<2x1x352xf32, #tpu.memory_space<vmem>>, vector<1x1x32xf32>
    %204 = vector.shape_cast %203 : vector<1x1x32xf32> to vector<1x32xf32>
    %c1_96 = arith.constant 1 : index
    %c0_97 = arith.constant 0 : index
    %c192_98 = arith.constant 192 : index
    %205 = vector.load %arg4[%c1_96, %c0_97, %c192_98] : memref<2x1x352xf32, #tpu.memory_space<vmem>>, vector<1x1x32xf32>
    %206 = vector.shape_cast %205 : vector<1x1x32xf32> to vector<1x32xf32>
    %c1_99 = arith.constant 1 : index
    %c0_100 = arith.constant 0 : index
    %c224_101 = arith.constant 224 : index
    %207 = vector.load %arg4[%c1_99, %c0_100, %c224_101] : memref<2x1x352xf32, #tpu.memory_space<vmem>>, vector<1x1x32xf32>
    %208 = vector.shape_cast %207 : vector<1x1x32xf32> to vector<1x32xf32>
    %c1_102 = arith.constant 1 : index
    %c0_103 = arith.constant 0 : index
    %c256_104 = arith.constant 256 : index
    %209 = vector.load %arg4[%c1_102, %c0_103, %c256_104] : memref<2x1x352xf32, #tpu.memory_space<vmem>>, vector<1x1x64xf32>
    %210 = vector.shape_cast %209 : vector<1x1x64xf32> to vector<1x64xf32>
    %c1_105 = arith.constant 1 : index
    %c0_106 = arith.constant 0 : index
    %c320_107 = arith.constant 320 : index
    %211 = vector.load %arg4[%c1_105, %c0_106, %c320_107] : memref<2x1x352xf32, #tpu.memory_space<vmem>>, vector<1x1x32xf32>
    %212 = vector.shape_cast %211 : vector<1x1x32xf32> to vector<1x32xf32>
    %cst_108 = arith.constant dense<0.000000e+00> : vector<16xf32>
    %213 = vector.multi_reduction <add>, %196, %cst_108 [1] : vector<16x32xf32> to vector<16xf32>
    %214 = vector.shape_cast %213 : vector<16xf32> to vector<16x1xf32>
    %cst_109 = arith.constant 3.200000e+01 : f32
    %215 = vector.broadcast %cst_109 : f32 to vector<16x1xf32>
    %216 = arith.divf %214, %215 : vector<16x1xf32>
    %217 = vector.broadcast %216 : vector<16x1xf32> to vector<16x32xf32>
    %218 = arith.subf %196, %217 : vector<16x32xf32>
    %219 = arith.mulf %218, %218 : vector<16x32xf32>
    %cst_110 = arith.constant dense<0.000000e+00> : vector<16xf32>
    %220 = vector.multi_reduction <add>, %219, %cst_110 [1] : vector<16x32xf32> to vector<16xf32>
    %221 = vector.shape_cast %220 : vector<16xf32> to vector<16x1xf32>
    %cst_111 = arith.constant 3.200000e+01 : f32
    %222 = vector.broadcast %cst_111 : f32 to vector<16x1xf32>
    %223 = arith.divf %221, %222 : vector<16x1xf32>
    %224 = vector.broadcast %216 : vector<16x1xf32> to vector<16x32xf32>
    %225 = arith.subf %196, %224 : vector<16x32xf32>
    %cst_112 = arith.constant 9.99999996E-13 : f32
    %226 = vector.broadcast %cst_112 : f32 to vector<16x1xf32>
    %227 = arith.addf %223, %226 : vector<16x1xf32>
    %228 = math.rsqrt %227 : vector<16x1xf32>
    %229 = vector.broadcast %228 : vector<16x1xf32> to vector<16x32xf32>
    %230 = arith.mulf %225, %229 : vector<16x32xf32>
    %231 = vector.broadcast %198 : vector<1x32xf32> to vector<16x32xf32>
    %232 = arith.mulf %230, %231 : vector<16x32xf32>
    %233 = vector.broadcast %200 : vector<1x32xf32> to vector<16x32xf32>
    %234 = arith.addf %232, %233 : vector<16x32xf32>
    %c1_113 = arith.constant 1 : index
    %c0_114 = arith.constant 0 : index
    %c0_115 = arith.constant 0 : index
    %235 = vector.load %arg2[%c1_113, %c0_114, %c0_115] : memref<2x32x192xf32, #tpu.memory_space<vmem>>, vector<1x32x96xf32>
    %236 = vector.shape_cast %235 : vector<1x32x96xf32> to vector<32x96xf32>
    %cst_116 = arith.constant dense<0.000000e+00> : vector<16x96xf32>
    %237 = tpu.matmul %234, %236, %cst_116 {dimension_numbers = #tpu.dot_dimension_numbers<[1], [0], [0], [1], [0, 0, 1, 1], [], []>} : vector<16x32xf32>, vector<32x96xf32>, vector<16x96xf32> -> vector<16x96xf32>
    %238 = vector.broadcast %202 : vector<1x96xf32> to vector<16x96xf32>
    %239 = arith.addf %237, %238 : vector<16x96xf32>
    %240 = vector.extract_strided_slice %239 {offsets = [0, 0], sizes = [16, 32], strides = [1, 1]} : vector<16x96xf32> to vector<16x32xf32>
    %241 = vector.extract_strided_slice %239 {offsets = [0, 32], sizes = [16, 32], strides = [1, 1]} : vector<16x96xf32> to vector<16x32xf32>
    %242 = vector.extract_strided_slice %239 {offsets = [0, 64], sizes = [16, 32], strides = [1, 1]} : vector<16x96xf32> to vector<16x32xf32>
    %cst_117 = arith.constant 0.000000e+00 : f32
    %243 = vector.broadcast %cst_117 : f32 to vector<16x32xf32>
    %244 = vector.extract_strided_slice %240 {offsets = [0, 0], sizes = [16, 16], strides = [1, 1]} : vector<16x32xf32> to vector<16x16xf32>
    %245 = vector.extract_strided_slice %241 {offsets = [0, 0], sizes = [16, 16], strides = [1, 1]} : vector<16x32xf32> to vector<16x16xf32>
    %cst_118 = arith.constant dense<0.000000e+00> : vector<16x16xf32>
    %246 = tpu.matmul %244, %245, %cst_118 {dimension_numbers = #tpu.dot_dimension_numbers<[1], [1], [0], [0], [0, 0, 1, 0], [], []>} : vector<16x16xf32>, vector<16x16xf32>, vector<16x16xf32> -> vector<16x16xf32>
    %cst_119 = arith.constant 2.500000e-01 : f32
    %247 = vector.broadcast %cst_119 : f32 to vector<16x16xf32>
    %248 = arith.mulf %246, %247 : vector<16x16xf32>
    %249 = arith.addf %248, %28 : vector<16x16xf32>
    %cst_120 = arith.constant dense<0xFF800000> : vector<16xf32>
    %250 = vector.multi_reduction <maximumf>, %249, %cst_120 [1] : vector<16x16xf32> to vector<16xf32>
    %251 = vector.shape_cast %250 : vector<16xf32> to vector<16x1xf32>
    %252 = vector.broadcast %251 : vector<16x1xf32> to vector<16x16xf32>
    %253 = arith.subf %249, %252 : vector<16x16xf32>
    %254 = math.exp %253 : vector<16x16xf32>
    %cst_121 = arith.constant dense<0.000000e+00> : vector<16xf32>
    %255 = vector.multi_reduction <add>, %254, %cst_121 [1] : vector<16x16xf32> to vector<16xf32>
    %256 = vector.shape_cast %255 : vector<16xf32> to vector<16x1xf32>
    %257 = vector.broadcast %256 : vector<16x1xf32> to vector<16x16xf32>
    %258 = arith.divf %254, %257 : vector<16x16xf32>
    %259 = vector.extract_strided_slice %242 {offsets = [0, 0], sizes = [16, 16], strides = [1, 1]} : vector<16x32xf32> to vector<16x16xf32>
    %cst_122 = arith.constant dense<0.000000e+00> : vector<16x16xf32>
    %260 = tpu.matmul %258, %259, %cst_122 {dimension_numbers = #tpu.dot_dimension_numbers<[1], [0], [0], [1], [0, 0, 1, 1], [], []>} : vector<16x16xf32>, vector<16x16xf32>, vector<16x16xf32> -> vector<16x16xf32>
    %c1_123 = arith.constant 1 : index
    %c0_124 = arith.constant 0 : index
    %c96_125 = arith.constant 96 : index
    %261 = vector.load %arg2[%c1_123, %c0_124, %c96_125] : memref<2x32x192xf32, #tpu.memory_space<vmem>>, vector<1x16x32xf32>
    %262 = vector.shape_cast %261 : vector<1x16x32xf32> to vector<16x32xf32>
    %cst_126 = arith.constant dense<0.000000e+00> : vector<16x32xf32>
    %263 = tpu.matmul %260, %262, %cst_126 {dimension_numbers = #tpu.dot_dimension_numbers<[1], [0], [0], [1], [0, 0, 1, 1], [], []>} : vector<16x16xf32>, vector<16x32xf32>, vector<16x32xf32> -> vector<16x32xf32>
    %264 = arith.addf %243, %263 : vector<16x32xf32>
    %265 = vector.extract_strided_slice %240 {offsets = [0, 16], sizes = [16, 16], strides = [1, 1]} : vector<16x32xf32> to vector<16x16xf32>
    %266 = vector.extract_strided_slice %241 {offsets = [0, 16], sizes = [16, 16], strides = [1, 1]} : vector<16x32xf32> to vector<16x16xf32>
    %cst_127 = arith.constant dense<0.000000e+00> : vector<16x16xf32>
    %267 = tpu.matmul %265, %266, %cst_127 {dimension_numbers = #tpu.dot_dimension_numbers<[1], [1], [0], [0], [0, 0, 1, 0], [], []>} : vector<16x16xf32>, vector<16x16xf32>, vector<16x16xf32> -> vector<16x16xf32>
    %cst_128 = arith.constant 2.500000e-01 : f32
    %268 = vector.broadcast %cst_128 : f32 to vector<16x16xf32>
    %269 = arith.mulf %267, %268 : vector<16x16xf32>
    %270 = arith.addf %269, %28 : vector<16x16xf32>
    %cst_129 = arith.constant dense<0xFF800000> : vector<16xf32>
    %271 = vector.multi_reduction <maximumf>, %270, %cst_129 [1] : vector<16x16xf32> to vector<16xf32>
    %272 = vector.shape_cast %271 : vector<16xf32> to vector<16x1xf32>
    %273 = vector.broadcast %272 : vector<16x1xf32> to vector<16x16xf32>
    %274 = arith.subf %270, %273 : vector<16x16xf32>
    %275 = math.exp %274 : vector<16x16xf32>
    %cst_130 = arith.constant dense<0.000000e+00> : vector<16xf32>
    %276 = vector.multi_reduction <add>, %275, %cst_130 [1] : vector<16x16xf32> to vector<16xf32>
    %277 = vector.shape_cast %276 : vector<16xf32> to vector<16x1xf32>
    %278 = vector.broadcast %277 : vector<16x1xf32> to vector<16x16xf32>
    %279 = arith.divf %275, %278 : vector<16x16xf32>
    %280 = vector.extract_strided_slice %242 {offsets = [0, 16], sizes = [16, 16], strides = [1, 1]} : vector<16x32xf32> to vector<16x16xf32>
    %cst_131 = arith.constant dense<0.000000e+00> : vector<16x16xf32>
    %281 = tpu.matmul %279, %280, %cst_131 {dimension_numbers = #tpu.dot_dimension_numbers<[1], [0], [0], [1], [0, 0, 1, 1], [], []>} : vector<16x16xf32>, vector<16x16xf32>, vector<16x16xf32> -> vector<16x16xf32>
    %c1_132 = arith.constant 1 : index
    %c16_133 = arith.constant 16 : index
    %c96_134 = arith.constant 96 : index
    %282 = vector.load %arg2[%c1_132, %c16_133, %c96_134] : memref<2x32x192xf32, #tpu.memory_space<vmem>>, vector<1x16x32xf32>
    %283 = vector.shape_cast %282 : vector<1x16x32xf32> to vector<16x32xf32>
    %cst_135 = arith.constant dense<0.000000e+00> : vector<16x32xf32>
    %284 = tpu.matmul %281, %283, %cst_135 {dimension_numbers = #tpu.dot_dimension_numbers<[1], [0], [0], [1], [0, 0, 1, 1], [], []>} : vector<16x16xf32>, vector<16x32xf32>, vector<16x32xf32> -> vector<16x32xf32>
    %285 = arith.addf %264, %284 : vector<16x32xf32>
    %286 = arith.addf %196, %285 : vector<16x32xf32>
    %287 = vector.broadcast %204 : vector<1x32xf32> to vector<16x32xf32>
    %288 = arith.addf %286, %287 : vector<16x32xf32>
    %cst_136 = arith.constant dense<0.000000e+00> : vector<16xf32>
    %289 = vector.multi_reduction <add>, %288, %cst_136 [1] : vector<16x32xf32> to vector<16xf32>
    %290 = vector.shape_cast %289 : vector<16xf32> to vector<16x1xf32>
    %cst_137 = arith.constant 3.200000e+01 : f32
    %291 = vector.broadcast %cst_137 : f32 to vector<16x1xf32>
    %292 = arith.divf %290, %291 : vector<16x1xf32>
    %293 = vector.broadcast %292 : vector<16x1xf32> to vector<16x32xf32>
    %294 = arith.subf %288, %293 : vector<16x32xf32>
    %295 = arith.mulf %294, %294 : vector<16x32xf32>
    %cst_138 = arith.constant dense<0.000000e+00> : vector<16xf32>
    %296 = vector.multi_reduction <add>, %295, %cst_138 [1] : vector<16x32xf32> to vector<16xf32>
    %297 = vector.shape_cast %296 : vector<16xf32> to vector<16x1xf32>
    %cst_139 = arith.constant 3.200000e+01 : f32
    %298 = vector.broadcast %cst_139 : f32 to vector<16x1xf32>
    %299 = arith.divf %297, %298 : vector<16x1xf32>
    %300 = vector.broadcast %292 : vector<16x1xf32> to vector<16x32xf32>
    %301 = arith.subf %288, %300 : vector<16x32xf32>
    %cst_140 = arith.constant 9.99999996E-13 : f32
    %302 = vector.broadcast %cst_140 : f32 to vector<16x1xf32>
    %303 = arith.addf %299, %302 : vector<16x1xf32>
    %304 = math.rsqrt %303 : vector<16x1xf32>
    %305 = vector.broadcast %304 : vector<16x1xf32> to vector<16x32xf32>
    %306 = arith.mulf %301, %305 : vector<16x32xf32>
    %307 = vector.broadcast %206 : vector<1x32xf32> to vector<16x32xf32>
    %308 = arith.mulf %306, %307 : vector<16x32xf32>
    %309 = vector.broadcast %208 : vector<1x32xf32> to vector<16x32xf32>
    %310 = arith.addf %308, %309 : vector<16x32xf32>
    %c1_141 = arith.constant 1 : index
    %c0_142 = arith.constant 0 : index
    %c128_143 = arith.constant 128 : index
    %311 = vector.load %arg2[%c1_141, %c0_142, %c128_143] : memref<2x32x192xf32, #tpu.memory_space<vmem>>, vector<1x32x64xf32>
    %312 = vector.shape_cast %311 : vector<1x32x64xf32> to vector<32x64xf32>
    %cst_144 = arith.constant dense<0.000000e+00> : vector<16x64xf32>
    %313 = tpu.matmul %310, %312, %cst_144 {dimension_numbers = #tpu.dot_dimension_numbers<[1], [0], [0], [1], [0, 0, 1, 1], [], []>} : vector<16x32xf32>, vector<32x64xf32>, vector<16x64xf32> -> vector<16x64xf32>
    %314 = vector.broadcast %210 : vector<1x64xf32> to vector<16x64xf32>
    %315 = arith.addf %313, %314 : vector<16x64xf32>
    %cst_145 = arith.constant 5.000000e-01 : f32
    %316 = vector.broadcast %cst_145 : f32 to vector<16x64xf32>
    %317 = arith.mulf %316, %315 : vector<16x64xf32>
    %cst_146 = arith.constant 0.707106769 : f32
    %318 = vector.broadcast %cst_146 : f32 to vector<16x64xf32>
    %319 = arith.mulf %315, %318 : vector<16x64xf32>
    %320 = math.absf %319 : vector<16x64xf32>
    %cst_147 = arith.constant 0.327591091 : f32
    %321 = vector.broadcast %cst_147 : f32 to vector<16x64xf32>
    %322 = arith.mulf %321, %320 : vector<16x64xf32>
    %cst_148 = arith.constant 1.000000e+00 : f32
    %323 = vector.broadcast %cst_148 : f32 to vector<16x64xf32>
    %324 = arith.addf %323, %322 : vector<16x64xf32>
    %cst_149 = arith.constant 1.000000e+00 : f32
    %325 = vector.broadcast %cst_149 : f32 to vector<16x64xf32>
    %326 = arith.divf %325, %324 : vector<16x64xf32>
    %cst_150 = arith.constant 1.06140542 : f32
    %327 = vector.broadcast %cst_150 : f32 to vector<16x64xf32>
    %328 = arith.mulf %326, %327 : vector<16x64xf32>
    %cst_151 = arith.constant -1.45315206 : f32
    %329 = vector.broadcast %cst_151 : f32 to vector<16x64xf32>
    %330 = arith.addf %329, %328 : vector<16x64xf32>
    %331 = arith.mulf %326, %330 : vector<16x64xf32>
    %cst_152 = arith.constant 1.42141378 : f32
    %332 = vector.broadcast %cst_152 : f32 to vector<16x64xf32>
    %333 = arith.addf %332, %331 : vector<16x64xf32>
    %334 = arith.mulf %326, %333 : vector<16x64xf32>
    %cst_153 = arith.constant -0.284496725 : f32
    %335 = vector.broadcast %cst_153 : f32 to vector<16x64xf32>
    %336 = arith.addf %335, %334 : vector<16x64xf32>
    %337 = arith.mulf %326, %336 : vector<16x64xf32>
    %cst_154 = arith.constant 0.254829586 : f32
    %338 = vector.broadcast %cst_154 : f32 to vector<16x64xf32>
    %339 = arith.addf %338, %337 : vector<16x64xf32>
    %340 = arith.mulf %326, %339 : vector<16x64xf32>
    %cst_155 = arith.constant 0.000000e+00 : f32
    %341 = vector.broadcast %cst_155 : f32 to vector<16x64xf32>
    %342 = arith.subf %341, %320 : vector<16x64xf32>
    %343 = arith.mulf %342, %320 : vector<16x64xf32>
    %344 = math.exp %343 : vector<16x64xf32>
    %345 = arith.mulf %340, %344 : vector<16x64xf32>
    %cst_156 = arith.constant 1.000000e+00 : f32
    %346 = vector.broadcast %cst_156 : f32 to vector<16x64xf32>
    %347 = arith.subf %346, %345 : vector<16x64xf32>
    %cst_157 = arith.constant 0.000000e+00 : f32
    %348 = vector.broadcast %cst_157 : f32 to vector<16x64xf32>
    %349 = arith.cmpf olt, %319, %348 : vector<16x64xf32>
    %cst_158 = arith.constant 0.000000e+00 : f32
    %350 = vector.broadcast %cst_158 : f32 to vector<16x64xf32>
    %351 = arith.subf %350, %347 : vector<16x64xf32>
    %352 = arith.select %349, %351, %347 : vector<16x64xi1>, vector<16x64xf32>
    %cst_159 = arith.constant 1.000000e+00 : f32
    %353 = vector.broadcast %cst_159 : f32 to vector<16x64xf32>
    %354 = arith.addf %353, %352 : vector<16x64xf32>
    %355 = arith.mulf %317, %354 : vector<16x64xf32>
    %c1_160 = arith.constant 1 : index
    %c0_161 = arith.constant 0 : index
    %c0_162 = arith.constant 0 : index
    %356 = vector.load %arg3[%c1_160, %c0_161, %c0_162] : memref<2x64x32xf32, #tpu.memory_space<vmem>>, vector<1x64x32xf32>
    %357 = vector.shape_cast %356 : vector<1x64x32xf32> to vector<64x32xf32>
    %cst_163 = arith.constant dense<0.000000e+00> : vector<16x32xf32>
    %358 = tpu.matmul %355, %357, %cst_163 {dimension_numbers = #tpu.dot_dimension_numbers<[1], [0], [0], [1], [0, 0, 1, 1], [], []>} : vector<16x64xf32>, vector<64x32xf32>, vector<16x32xf32> -> vector<16x32xf32>
    %359 = arith.addf %288, %358 : vector<16x32xf32>
    %360 = vector.broadcast %212 : vector<1x32xf32> to vector<16x32xf32>
    %361 = arith.addf %359, %360 : vector<16x32xf32>
    %cst_164 = arith.constant dense<0.000000e+00> : vector<16xf32>
    %362 = vector.multi_reduction <add>, %361, %cst_164 [1] : vector<16x32xf32> to vector<16xf32>
    %363 = vector.shape_cast %362 : vector<16xf32> to vector<16x1xf32>
    %cst_165 = arith.constant 3.200000e+01 : f32
    %364 = vector.broadcast %cst_165 : f32 to vector<16x1xf32>
    %365 = arith.divf %363, %364 : vector<16x1xf32>
    %366 = vector.broadcast %365 : vector<16x1xf32> to vector<16x32xf32>
    %367 = arith.subf %361, %366 : vector<16x32xf32>
    %368 = arith.mulf %367, %367 : vector<16x32xf32>
    %cst_166 = arith.constant dense<0.000000e+00> : vector<16xf32>
    %369 = vector.multi_reduction <add>, %368, %cst_166 [1] : vector<16x32xf32> to vector<16xf32>
    %370 = vector.shape_cast %369 : vector<16xf32> to vector<16x1xf32>
    %cst_167 = arith.constant 3.200000e+01 : f32
    %371 = vector.broadcast %cst_167 : f32 to vector<16x1xf32>
    %372 = arith.divf %370, %371 : vector<16x1xf32>
    %373 = vector.broadcast %365 : vector<16x1xf32> to vector<16x32xf32>
    %374 = arith.subf %361, %373 : vector<16x32xf32>
    %cst_168 = arith.constant 9.99999996E-13 : f32
    %375 = vector.broadcast %cst_168 : f32 to vector<16x1xf32>
    %376 = arith.addf %372, %375 : vector<16x1xf32>
    %377 = math.rsqrt %376 : vector<16x1xf32>
    %378 = vector.broadcast %377 : vector<16x1xf32> to vector<16x32xf32>
    %379 = arith.mulf %374, %378 : vector<16x32xf32>
    %380 = vector.broadcast %2 : vector<1x32xf32> to vector<16x32xf32>
    %381 = arith.mulf %379, %380 : vector<16x32xf32>
    %382 = vector.broadcast %3 : vector<1x32xf32> to vector<16x32xf32>
    %383 = arith.addf %381, %382 : vector<16x32xf32>
    %c0_169 = arith.constant 0 : index
    %c0_170 = arith.constant 0 : index
    %384 = vector.load %arg5[%c0_169, %c0_170] : memref<40x128xf32, #tpu.memory_space<vmem>>, vector<32x128xf32>
    %cst_171 = arith.constant dense<0.000000e+00> : vector<16x128xf32>
    %385 = tpu.matmul %383, %384, %cst_171 {dimension_numbers = #tpu.dot_dimension_numbers<[1], [0], [0], [1], [0, 0, 1, 1], [], []>} : vector<16x32xf32>, vector<32x128xf32>, vector<16x128xf32> -> vector<16x128xf32>
    %c32_172 = arith.constant 32 : index
    %c0_173 = arith.constant 0 : index
    %386 = vector.load %arg5[%c32_172, %c0_173] : memref<40x128xf32, #tpu.memory_space<vmem>>, vector<1x128xf32>
    %387 = vector.broadcast %386 : vector<1x128xf32> to vector<16x128xf32>
    %388 = arith.addf %385, %387 : vector<16x128xf32>
    %c0_174 = arith.constant 0 : index
    %c0_175 = arith.constant 0 : index
    %389 = vector.load %arg6[%c0_174, %c0_175] : memref<16x128xf32, #tpu.memory_space<vmem>>, vector<16x128xf32>
    tpu.vector_store %arg6[%c0_174, %c0_175], %388 {strides = array<i32>} : memref<16x128xf32, #tpu.memory_space<vmem>>, vector<16x128xf32>,
    return
  }
}

</mosaic_0001>

<llo_original>
// kernel: vit_wrapper_forward.1
$region0: #{vit_wrapper_forward.1}
  #allocation0 [shape = 'u32[]', space=smem, size = 0x4, offset = 0x4, fixed_abs, tag = 'smem constant byte address 0x4 - core index']
  #allocation1 [shape = 'u32[72,128]{1,0:T(1,128)}', space=vmem, size = 0x9000, scoped, tag = 'internal scratch']
  %s0 = inlined_call_operand.vmem [shape: f32[16,192], index: 0, kind: input, shape index: {}]
  %s1 = inlined_call_operand.vmem [shape: f32[224,32], index: 1, kind: input, shape index: {}]
  %s2 = inlined_call_operand.vmem [shape: f32[2,32,192], index: 2, kind: input, shape index: {}]
  %s3 = inlined_call_operand.vmem [shape: f32[2,64,32], index: 3, kind: input, shape index: {}]
  %s4 = inlined_call_operand.vmem [shape: f32[2,1,352], index: 4, kind: input, shape index: {}]
  %s5 = inlined_call_operand.vmem [shape: f32[40,128], index: 5, kind: input, shape index: {}]
  %s6 = inlined_call_operand.vmem [shape: f32[16,128], index: 6, kind: output, shape index: {}]
  %s7 = sld [smem:[#allocation0]]
  $region34: #{vit_wrapper_forward.1} parent=0
    _
  %s9 = ssub.s32 1, %s7
  %s10 = scalar_select 0, %s9, %s7
  // Predicated region
  $region2: #{vit_wrapper_forward.1} parent=0 // pred_check
    _
  $region3: #{vit_wrapper_forward.1} parent=0 // pred_check_branch
    %12 = sbr.rel (0) target = $region5
  $region4: #{vit_wrapper_forward.1} parent=0 // pred_region
    _
  $region5: #{vit_wrapper_forward.1} parent=0 // pred_fallthru
    _
  // Predicated region
  $region6: #{vit_wrapper_forward.1} parent=0 // pred_check
    _
  $region7: #{vit_wrapper_forward.1} parent=0 // pred_check_branch
    %14 = sbr.rel (0) target = $region9
  $region8: #{vit_wrapper_forward.1} parent=0 // pred_region
    _
  $region9: #{vit_wrapper_forward.1} parent=0 // pred_fallthru
    _
  // Predicated region
  $region10: #{vit_wrapper_forward.1} parent=0 // pred_check
    _
  $region11: #{vit_wrapper_forward.1} parent=0 // pred_check_branch
    %16 = sbr.rel (0) target = $region13
  $region12: #{vit_wrapper_forward.1} parent=0 // pred_region
    _
  $region13: #{vit_wrapper_forward.1} parent=0 // pred_fallthru
    _
  // Predicated region
  $region14: #{vit_wrapper_forward.1} parent=0 // pred_check
    _
  $region15: #{vit_wrapper_forward.1} parent=0 // pred_check_branch
    %18 = sbr.rel (0) target = $region17
  $region16: #{vit_wrapper_forward.1} parent=0 // pred_region
    _
  $region17: #{vit_wrapper_forward.1} parent=0 // pred_fallthru
    _
  // Predicated region
  $region18: #{vit_wrapper_forward.1} parent=0 // pred_check
    _
  $region19: #{vit_wrapper_forward.1} parent=0 // pred_check_branch
    %20 = sbr.rel (0) target = $region21
  $region20: #{vit_wrapper_forward.1} parent=0 // pred_region
    _
  $region21: #{vit_wrapper_forward.1} parent=0 // pred_fallthru
    _
  // Predicated region
  $region22: #{vit_wrapper_forward.1} parent=0 // pred_check
    _
  $region23: #{vit_wrapper_forward.1} parent=0 // pred_check_branch
    %22 = sbr.rel (0) target = $region25
  $region24: #{vit_wrapper_forward.1} parent=0 // pred_region
    _
  $region25: #{vit_wrapper_forward.1} parent=0 // pred_fallthru
    _
  %v23 = vld [vmem:[%s1] sm:$0xff]
  %v24 = vld [vmem:[%s1 + $0x8] sm:$0xff]
  %v25 = vld [vmem:[%s1 + $0x10] sm:$0xff]
  %v26 = vld [vmem:[%s1 + $0x18] sm:$0xff]
  %v27 = vld [vmem:[%s1 + $0x20] sm:$0xff]
  %v28 = vld [vmem:[%s1 + $0x28] sm:$0xff]
  %v29 = vld [vmem:[%s1 + $0x30] sm:$0xff]
  %v30 = vld [vmem:[%s1 + $0x38] sm:$0xff]
  %v31 = vld [vmem:[%s1 + $0x40] sm:$0xff]
  %v32 = vld [vmem:[%s1 + $0x48] sm:$0xff]
  %v33 = vld [vmem:[%s1 + $0x50] sm:$0xff]
  %v34 = vld [vmem:[%s1 + $0x58] sm:$0xff]
  %v35 = vld [vmem:[%s1 + $0x60] sm:$0xff]
  %v36 = vld [vmem:[%s1 + $0x68] sm:$0xff]
  %v37 = vld [vmem:[%s1 + $0x70] sm:$0xff]
  %v38 = vld [vmem:[%s1 + $0x78] sm:$0xff]
  %v39 = vld [vmem:[%s1 + $0x80] sm:$0xff]
  %v40 = vld [vmem:[%s1 + $0x88] sm:$0xff]
  %v41 = vld [vmem:[%s1 + $0x90] sm:$0xff]
  %v42 = vld [vmem:[%s1 + $0x98] sm:$0xff]
  %v43 = vld [vmem:[%s1 + $0xa0] sm:$0xff]
  %v44 = vld [vmem:[%s1 + $0xa8] sm:$0xff]
  %v45 = vld [vmem:[%s1 + $0xb0] sm:$0xff]
  %v46 = vld [vmem:[%s1 + $0xb8] sm:$0xff]
  %v47 = vld [vmem:[%s1 + $0xc0] sm:$0xff]
  %v48 = vld [vmem:[%s1 + $0xc8] sm:$0xff]
  %v49 = vld [vmem:[%s1 + $0xd0] sm:$0x1]
  %v50 = vld [vmem:[%s1 + $0xd8] sm:$0x1]
  %v51 = vlaneseq
  %v52 = vshrl.u32 %v51, 7
  %v53 = vadd.s32 %v52, 8
  %v54 = vlaneseq
  %v55 = vand.u32 %v54, 127
  %vm56 = vcmp.ge.s32.totalorder %v52, 5
  %vm57 = vcmp.ge.s32.totalorder %v53, 5
  %vm58 = vcmp.ge.s32.totalorder %v55, 5
  %vm59 = vmxor %vm56, %vm58
  %vm60 = vmxor %vm57, %vm58
  %vm61 = vmxor %vm59, 1
  %vm62 = vmxor %vm60, 1
  %vm63 = vcmp.ge.s32.totalorder %v52, 10
  %vm64 = vcmp.ge.s32.totalorder %v53, 10
  %vm65 = vcmp.ge.s32.totalorder %v55, 10
  %vm66 = vmxor %vm63, %vm65
  %vm67 = vmxor %vm64, %vm65
  %vm68 = vmxor %vm66, 1
  %vm69 = vmxor %vm67, 1
  %vm70 = vmand %vm61, %vm68
  %vm71 = vmand %vm62, %vm69
  %vm72 = vcmp.ge.s32.totalorder %v52, 15
  %vm73 = vcmp.ge.s32.totalorder %v53, 15
  %vm74 = vcmp.ge.s32.totalorder %v55, 15
  %vm75 = vmxor %vm72, %vm74
  %vm76 = vmxor %vm73, %vm74
  %vm77 = vmxor %vm75, 1
  %vm78 = vmxor %vm76, 1
  %vm79 = vmand %vm70, %vm77
  %vm80 = vmand %vm71, %vm78
  %v81 = vsel %vm79, 0.0, -1e+30
  %v82 = vsel %vm80, 0.0, -1e+30
  %v83 = vld [vmem:[%s0] sm:$0xff]
  %v84 = vld [vmem:[%s0 + $0x8] sm:$0xff]
  %v85 = vld [vmem:[%s0 + $0x10] sm:$0xff]
  %v86 = vld [vmem:[%s0 + $0x18] sm:$0xff]
  %vm87 = vcmask 523264
  %v89 = vsel %vm87, %v84, 0
  %v92 = vsel %vm87, %v86, 0
  %94 = vmatpush.msra.mxu0 %v38
  %95 = vmatpush.msra.mxu0 %v37
  %96 = vmatpush.msra.mxu0 %v36
  %97 = vmatpush.msra.mxu0 %v35
  %98 = vmatpush.msra.mxu0 %v34
  %99 = vmatpush.msra.mxu0 %v33
  %100 = vmatpush.msra.mxu0 %v32
  %101 = vmatpush.msra.mxu0 %v31
  %102 = vmatpush.msra.mxu0 %v30
  %103 = vmatpush.msra.mxu0 %v29
  %104 = vmatpush.msra.mxu0 %v28
  %105 = vmatpush.msra.mxu0 %v27
  %106 = vmatpush.msra.mxu0 %v26
  %107 = vmatpush.msra.mxu0 %v25
  %108 = vmatpush.msra.mxu0 %v24
  %109 = vmatpush.msra.mxu0 %v23
  %110 = vmatmul.f32.gmra.mxu0 %v83
  %v111 = vpop.f32.mrf.mxu0
  %v112 = vadd.f32 %v47, %v111
  %113 = vmatmul.f32.gmra.mxu0 %v85
  %v114 = vpop.f32.mrf.mxu0
  %v115 = vadd.f32 %v48, %v114
  %116 = vdwg.mxu0
  %117 = vmatpush.msra.mxu0 0.0
  %118 = vmatpush.msra.mxu0 0.0
  %119 = vmatpush.msra.mxu0 0.0
  %120 = vmatpush.msra.mxu0 0.0
  %121 = vmatpush.msra.mxu0 0.0
  %122 = vmatpush.msra.mxu0 0.0
  %123 = vmatpush.msra.mxu0 0.0
  %124 = vmatpush.msra.mxu0 0.0
  %125 = vmatpush.msra.mxu0 %v46
  %126 = vmatpush.msra.mxu0 %v45
  %127 = vmatpush.msra.mxu0 %v44
  %128 = vmatpush.msra.mxu0 %v43
  %129 = vmatpush.msra.mxu0 %v42
  %130 = vmatpush.msra.mxu0 %v41
  %131 = vmatpush.msra.mxu0 %v40
  %132 = vmatpush.msra.mxu0 %v39
  %133 = vmatmul.f32.gmra.mxu0 %v89
  %v134 = vpop.f32.mrf.mxu0
  %v135 = vadd.f32 %v112, %v134
  %136 = vmatmul.f32.gmra.mxu0 %v92
  %v137 = vpop.f32.mrf.mxu0
  %v138 = vadd.f32 %v115, %v137
  %139 = vdwg.mxu0
  %v140 = vld [vmem:[%s4] sm:$0x1]
  %v141 = vld [vmem:[%s4] sm:$0x3]
  %v142 = vld [vmem:[%s4 + $0x1] sm:$0x1]
  %v143 = vld [vmem:[%s4 + $0x2] sm:$0x1]
  %vm144 = vcmask 261120
  %v145 = vsel %vm144, %v135, 0.0
  %146 = vadd.xlane.f32.xlu0 %v145
  %v147 = vpop.xlane.xlu0 %146
  %v148 = vsel %vm144, %v138, 0.0
  %149 = vadd.xlane.f32.xlu0 %v148
  %v150 = vpop.xlane.xlu0 %149
  %v151 = vrcp.pop 32.0
  %v152 = vmul.f32 32.0, %v151
  %v153 = vsub.f32 1.0, %v152
  %v154 = vmul.f32 %v151, %v153
  %v155 = vadd.f32 %v151, %v154
  %vm156 = vweird.f32 %v151
  %v157 = vsel %vm156, %v151, %v155
  %v158 = vmul.f32 %v147, %v157
  %v159 = vmul.f32 %v150, %v157
  %v160 = vsub.f32 %v135, %v158
  %v161 = vsub.f32 %v138, %v159
  %v162 = vmul.f32 %v160, %v160
  %v163 = vmul.f32 %v161, %v161
  %v164 = vsel %vm144, %v162, 0.0
  %165 = vadd.xlane.f32.xlu0 %v164
  %v166 = vpop.xlane.xlu0 %165
  %v167 = vsel %vm144, %v163, 0.0
  %168 = vadd.xlane.f32.xlu0 %v167
  %v169 = vpop.xlane.xlu0 %168
  %v170 = vmul.f32 %v166, %v157
  %v171 = vmul.f32 %v169, %v157
  %v172 = vadd.f32 %v170, 1e-12
  %v173 = vadd.f32 %v171, 1e-12
  %v174 = vrsqrt.pop %v172
  %v175 = vmul.f32 %v174, %v172
  %v176 = vmul.f32 %v175, %v174
  %v177 = vmul.f32 0.5, %v176
  %v178 = vsub.f32 1.5, %v177
  %v179 = vmul.f32 %v174, %v178
  %vm180 = vweird.f32 %v172
  %vm181 = vweird.f32 %v174
  %vm182 = vmor %vm180, %vm181
  %v183 = vsel %vm182, %v174, %v179
  %v184 = vrsqrt.pop %v173
  %v185 = vmul.f32 %v184, %v173
  %v186 = vmul.f32 %v185, %v184
  %v187 = vmul.f32 0.5, %v186
  %v188 = vsub.f32 1.5, %v187
  %v189 = vmul.f32 %v184, %v188
  %vm190 = vweird.f32 %v173
  %vm191 = vweird.f32 %v184
  %vm192 = vmor %vm190, %vm191
  %v193 = vsel %vm192, %v184, %v189
  %v194 = vmul.f32 %v160, %v183
  %v195 = vmul.f32 %v161, %v193
  %v197 = vperm.slane %v140, 0
  %v199 = vmul.f32 %v194, %v197
  %v200 = vmul.f32 %v195, %v197
  %201 = vrot.lane.b32.xlu0 %v197, 96
  %v202 = vpop.permute.xlu0 %201
  %v204 = vadd.f32 %v199, %v202
  %v205 = vadd.f32 %v200, %v202
  %v206 = vld [vmem:[%s2] sm:$0xff]
  %v207 = vld [vmem:[%s2 + $0x10] sm:$0xff]
  %v208 = vld [vmem:[%s2 + $0x20] sm:$0xff]
  %v209 = vld [vmem:[%s2 + $0x30] sm:$0xff]
  %v211 = vperm.slane %v141, 0
  %v212 = vperm.slane %v141, 1
  %213 = vrot.lane.b32.xlu0 %v211, 64
  %v214 = vpop.permute.xlu0 %213
  %215 = vrot.lane.b32.xlu0 %v212, 64
  %v216 = vpop.permute.xlu0 %215
  %v217 = vsel %vm87, %v214, %v216
  %v220 = vsel %vm144, %v204, 0
  %v223 = vsel %vm144, %v205, 0
  %225 = vmatpush.msra.mxu0 0.0
  %226 = vmatpush.msra.mxu0 0.0
  %227 = vmatpush.msra.mxu0 0.0
  %228 = vmatpush.msra.mxu0 0.0
  %229 = vmatpush.msra.mxu0 0.0
  %230 = vmatpush.msra.mxu0 0.0
  %231 = vmatpush.msra.mxu0 0.0
  %232 = vmatpush.msra.mxu0 0.0
  %233 = vmatpush.msra.mxu0 0.0
  %234 = vmatpush.msra.mxu0 0.0
  %235 = vmatpush.msra.mxu0 0.0
  %236 = vmatpush.msra.mxu0 0.0
  %237 = vmatpush.msra.mxu0 %v209
  %238 = vmatpush.msra.mxu0 %v208
  %239 = vmatpush.msra.mxu0 %v207
  %240 = vmatpush.msra.mxu0 %v206
  %241 = vmatmul.f32.gmra.mxu0 %v220
  %v242 = vpop.f32.mrf.mxu0
  %v243 = vadd.f32 %v217, %v242
  %244 = vmatmul.f32.gmra.mxu0 %v223
  %v245 = vpop.f32.mrf.mxu0
  %v246 = vadd.f32 %v217, %v245
  %247 = vdwg.mxu0
  %250 = vrot.lane.b32.xlu0 %v243, 96
  %v251 = vpop.permute.xlu0 %250
  %252 = vrot.lane.b32.xlu0 %v246, 96
  %v253 = vpop.permute.xlu0 %252
  %vm254 = vcmask 130048
  %v255 = vsel %vm254, %v243, 0
  %v257 = vsel %vm254, %v246, 0
  %v259 = vsel %vm254, %v251, 0
  %v261 = vsel %vm254, %v253, 0
  %263 = vmatpush.xpose.msra.mxu0 0.0
  %264 = vmatpush.xpose.msra.mxu0 0.0
  %265 = vmatpush.xpose.msra.mxu0 0.0
  %266 = vmatpush.xpose.msra.mxu0 0.0
  %267 = vmatpush.xpose.msra.mxu0 0.0
  %268 = vmatpush.xpose.msra.mxu0 0.0
  %269 = vmatpush.xpose.msra.mxu0 0.0
  %270 = vmatpush.xpose.msra.mxu0 0.0
  %271 = vmatpush.xpose.msra.mxu0 0.0
  %272 = vmatpush.xpose.msra.mxu0 0.0
  %273 = vmatpush.xpose.msra.mxu0 0.0
  %274 = vmatpush.xpose.msra.mxu0 0.0
  %275 = vmatpush.xpose.msra.mxu0 0.0
  %276 = vmatpush.xpose.msra.mxu0 0.0
  %277 = vmatpush.xpose.msra.mxu0 %v261
  %278 = vmatpush.xpose.msra.mxu0 %v259
  %279 = vmatmul.f32.gmra.mxu0 %v255
  %v280 = vpop.f32.mrf.mxu0
  %v281 = vadd.f32 0.0, %v280
  %282 = vmatmul.f32.gmra.mxu0 %v257
  %v283 = vpop.f32.mrf.mxu0
  %v284 = vadd.f32 0.0, %v283
  %285 = vdwg.mxu0
  %v286 = vmul.f32 %v281, 0.25
  %v287 = vmul.f32 %v284, 0.25
  %v288 = vadd.f32 %v286, %v81
  %v289 = vadd.f32 %v287, %v82
  %v290 = vsel %vm254, %v288, -inf
  %291 = vmax.xlane.f32.xlu0 %v290
  %v292 = vpop.xlane.xlu0 %291
  %v293 = vsel %vm254, %v289, -inf
  %294 = vmax.xlane.f32.xlu0 %v293
  %v295 = vpop.xlane.xlu0 %294
  %v296 = vsub.f32 %v288, %v292
  %v297 = vsub.f32 %v289, %v295
  %v298 = vmul.f32 %v296, 1.442695
  %v299 = vpow.pop %v298
  %v300 = vmul.f32 %v297, 1.442695
  %v301 = vpow.pop %v300
  %v302 = vsel %vm254, %v299, 0.0
  %303 = vadd.xlane.f32.xlu0 %v302
  %v304 = vpop.xlane.xlu0 %303
  %v305 = vsel %vm254, %v301, 0.0
  %306 = vadd.xlane.f32.xlu0 %v305
  %v307 = vpop.xlane.xlu0 %306
  %v308 = vrcp.pop %v304
  %v309 = vmul.f32 %v304, %v308
  %v310 = vsub.f32 1.0, %v309
  %v311 = vmul.f32 %v308, %v310
  %v312 = vadd.f32 %v308, %v311
  %vm313 = vweird.f32 %v304
  %vm314 = vweird.f32 %v308
  %vm315 = vmor %vm313, %vm314
  %v316 = vsel %vm315, %v308, %v312
  %v317 = vand.u32 2147483647, %v304
  %vm318 = vcmp.eq.f32.partialorder %v317, 8.507059e+37
  %v319 = vand.u32 %v304, 2147483648
  %v320 = vor.u32 1.1754944e-38, %v319
  %v321 = vsel %vm318, %v320, %v316
  %v322 = vmul.f32 %v299, %v321
  %v323 = vrcp.pop %v307
  %v324 = vmul.f32 %v307, %v323
  %v325 = vsub.f32 1.0, %v324
  %v326 = vmul.f32 %v323, %v325
  %v327 = vadd.f32 %v323, %v326
  %vm328 = vweird.f32 %v307
  %vm329 = vweird.f32 %v323
  %vm330 = vmor %vm328, %vm329
  %v331 = vsel %vm330, %v323, %v327
  %v332 = vand.u32 2147483647, %v307
  %vm333 = vcmp.eq.f32.partialorder %v332, 8.507059e+37
  %v334 = vand.u32 %v307, 2147483648
  %v335 = vor.u32 1.1754944e-38, %v334
  %v336 = vsel %vm333, %v335, %v331
  %v337 = vmul.f32 %v301, %v336
  %338 = vrot.lane.b32.xlu0 %v243, 64
  %v339 = vpop.permute.xlu0 %338
  %340 = vrot.lane.b32.xlu0 %v246, 64
  %v341 = vpop.permute.xlu0 %340
  %v345 = vsel %vm254, %v322, 0
  %v348 = vsel %vm254, %v337, 0
  %350 = vmatpush.msra.mxu0 0.0
  %351 = vmatpush.msra.mxu0 0.0
  %352 = vmatpush.msra.mxu0 0.0
  %353 = vmatpush.msra.mxu0 0.0
  %354 = vmatpush.msra.mxu0 0.0
  %355 = vmatpush.msra.mxu0 0.0
  %356 = vmatpush.msra.mxu0 0.0
  %357 = vmatpush.msra.mxu0 0.0
  %358 = vmatpush.msra.mxu0 0.0
  %359 = vmatpush.msra.mxu0 0.0
  %360 = vmatpush.msra.mxu0 0.0
  %361 = vmatpush.msra.mxu0 0.0
  %362 = vmatpush.msra.mxu0 0.0
  %363 = vmatpush.msra.mxu0 0.0
  %364 = vmatpush.msra.mxu0 %v341
  %365 = vmatpush.msra.mxu0 %v339
  %366 = vmatmul.f32.gmra.mxu0 %v345
  %v367 = vpop.f32.mrf.mxu0
  %v368 = vadd.f32 0.0, %v367
  %369 = vmatmul.f32.gmra.mxu0 %v348
  %v370 = vpop.f32.mrf.mxu0
  %v371 = vadd.f32 0.0, %v370
  %372 = vdwg.mxu0
  %v373 = vld [vmem:[%s2] sm:$0xff]
  %v374 = vld [vmem:[%s2 + $0x10] sm:$0xff]
  %375 = vrot.lane.b32.xlu0 %v243, 112
  %v376 = vpop.permute.xlu0 %375
  %377 = vrot.lane.b32.xlu0 %v246, 112
  %v378 = vpop.permute.xlu0 %377
  %379 = vrot.lane.b32.xlu0 %v243, 80
  %v380 = vpop.permute.xlu0 %379
  %381 = vrot.lane.b32.xlu0 %v246, 80
  %v382 = vpop.permute.xlu0 %381
  %v383 = vsel %vm254, %v376, 0
  %v385 = vsel %vm254, %v378, 0
  %v387 = vsel %vm254, %v380, 0
  %v389 = vsel %vm254, %v382, 0
  %391 = vmatpush.xpose.msra.mxu0 0.0
  %392 = vmatpush.xpose.msra.mxu0 0.0
  %393 = vmatpush.xpose.msra.mxu0 0.0
  %394 = vmatpush.xpose.msra.mxu0 0.0
  %395 = vmatpush.xpose.msra.mxu0 0.0
  %396 = vmatpush.xpose.msra.mxu0 0.0
  %397 = vmatpush.xpose.msra.mxu0 0.0
  %398 = vmatpush.xpose.msra.mxu0 0.0
  %399 = vmatpush.xpose.msra.mxu0 0.0
  %400 = vmatpush.xpose.msra.mxu0 0.0
  %401 = vmatpush.xpose.msra.mxu0 0.0
  %402 = vmatpush.xpose.msra.mxu0 0.0
  %403 = vmatpush.xpose.msra.mxu0 0.0
  %404 = vmatpush.xpose.msra.mxu0 0.0
  %405 = vmatpush.xpose.msra.mxu0 %v389
  %406 = vmatpush.xpose.msra.mxu0 %v387
  %407 = vmatmul.f32.gmra.mxu0 %v383
  %v408 = vpop.f32.mrf.mxu0
  %v409 = vadd.f32 0.0, %v408
  %410 = vmatmul.f32.gmra.mxu0 %v385
  %v411 = vpop.f32.mrf.mxu0
  %v412 = vadd.f32 0.0, %v411
  %413 = vdwg.mxu0
  %v414 = vmul.f32 %v409, 0.25
  %v415 = vmul.f32 %v412, 0.25
  %v416 = vadd.f32 %v414, %v81
  %v417 = vadd.f32 %v415, %v82
  %v418 = vsel %vm254, %v416, -inf
  %419 = vmax.xlane.f32.xlu0 %v418
  %v420 = vpop.xlane.xlu0 %419
  %v421 = vsel %vm254, %v417, -inf
  %422 = vmax.xlane.f32.xlu0 %v421
  %v423 = vpop.xlane.xlu0 %422
  %v424 = vsub.f32 %v416, %v420
  %v425 = vsub.f32 %v417, %v423
  %v426 = vmul.f32 %v424, 1.442695
  %v427 = vpow.pop %v426
  %v428 = vmul.f32 %v425, 1.442695
  %v429 = vpow.pop %v428
  %v430 = vsel %vm254, %v427, 0.0
  %431 = vadd.xlane.f32.xlu0 %v430
  %v432 = vpop.xlane.xlu0 %431
  %v433 = vsel %vm254, %v429, 0.0
  %434 = vadd.xlane.f32.xlu0 %v433
  %v435 = vpop.xlane.xlu0 %434
  %v436 = vrcp.pop %v432
  %v437 = vmul.f32 %v432, %v436
  %v438 = vsub.f32 1.0, %v437
  %v439 = vmul.f32 %v436, %v438
  %v440 = vadd.f32 %v436, %v439
  %vm441 = vweird.f32 %v432
  %vm442 = vweird.f32 %v436
  %vm443 = vmor %vm441, %vm442
  %v444 = vsel %vm443, %v436, %v440
  %v445 = vand.u32 2147483647, %v432
  %vm446 = vcmp.eq.f32.partialorder %v445, 8.507059e+37
  %v447 = vand.u32 %v432, 2147483648
  %v448 = vor.u32 1.1754944e-38, %v447
  %v449 = vsel %vm446, %v448, %v444
  %v450 = vmul.f32 %v427, %v449
  %v451 = vrcp.pop %v435
  %v452 = vmul.f32 %v435, %v451
  %v453 = vsub.f32 1.0, %v452
  %v454 = vmul.f32 %v451, %v453
  %v455 = vadd.f32 %v451, %v454
  %vm456 = vweird.f32 %v435
  %vm457 = vweird.f32 %v451
  %vm458 = vmor %vm456, %vm457
  %v459 = vsel %vm458, %v451, %v455
  %v460 = vand.u32 2147483647, %v435
  %vm461 = vcmp.eq.f32.partialorder %v460, 8.507059e+37
  %v462 = vand.u32 %v435, 2147483648
  %v463 = vor.u32 1.1754944e-38, %v462
  %v464 = vsel %vm461, %v463, %v459
  %v465 = vmul.f32 %v429, %v464
  %466 = vrot.lane.b32.xlu0 %v243, 48
  %v467 = vpop.permute.xlu0 %466
  %468 = vrot.lane.b32.xlu0 %v246, 48
  %v469 = vpop.permute.xlu0 %468
  %v473 = vsel %vm254, %v450, 0
  %v476 = vsel %vm254, %v465, 0
  %478 = vmatpush.msra.mxu0 0.0
  %479 = vmatpush.msra.mxu0 0.0
  %480 = vmatpush.msra.mxu0 0.0
  %481 = vmatpush.msra.mxu0 0.0
  %482 = vmatpush.msra.mxu0 0.0
  %483 = vmatpush.msra.mxu0 0.0
  %484 = vmatpush.msra.mxu0 0.0
  %485 = vmatpush.msra.mxu0 0.0
  %486 = vmatpush.msra.mxu0 0.0
  %487 = vmatpush.msra.mxu0 0.0
  %488 = vmatpush.msra.mxu0 0.0
  %489 = vmatpush.msra.mxu0 0.0
  %490 = vmatpush.msra.mxu0 0.0
  %491 = vmatpush.msra.mxu0 0.0
  %492 = vmatpush.msra.mxu0 %v469
  %493 = vmatpush.msra.mxu0 %v467
  %494 = vmatmul.f32.gmra.mxu0 %v473
  %v495 = vpop.f32.mrf.mxu0
  %v496 = vadd.f32 0.0, %v495
  %497 = vmatmul.f32.gmra.mxu0 %v476
  %v498 = vpop.f32.mrf.mxu0
  %v499 = vadd.f32 0.0, %v498
  %500 = vdwg.mxu0
  %503 = vrot.lane.b32.xlu0 %v208, 32
  %v504 = vpop.permute.xlu0 %503
  %505 = vrot.lane.b32.xlu0 %v209, 32
  %v506 = vpop.permute.xlu0 %505
  %v510 = vsel %vm254, %v496, 0
  %v513 = vsel %vm254, %v499, 0
  %515 = vmatpush.msra.mxu0 0.0
  %516 = vmatpush.msra.mxu0 0.0
  %517 = vmatpush.msra.mxu0 0.0
  %518 = vmatpush.msra.mxu0 0.0
  %519 = vmatpush.msra.mxu0 0.0
  %520 = vmatpush.msra.mxu0 0.0
  %521 = vmatpush.msra.mxu0 0.0
  %522 = vmatpush.msra.mxu0 0.0
  %523 = vmatpush.msra.mxu0 0.0
  %524 = vmatpush.msra.mxu0 0.0
  %525 = vmatpush.msra.mxu0 0.0
  %526 = vmatpush.msra.mxu0 0.0
  %527 = vmatpush.msra.mxu0 0.0
  %528 = vmatpush.msra.mxu0 0.0
  %529 = vmatpush.msra.mxu0 %v506
  %530 = vmatpush.msra.mxu0 %v504
  %531 = vmatmul.f32.gmra.mxu0 %v510
  %v532 = vpop.f32.mrf.mxu0
  %v533 = vadd.f32 0.0, %v532
  %534 = vmatmul.f32.gmra.mxu0 %v513
  %v535 = vpop.f32.mrf.mxu0
  %v536 = vadd.f32 0.0, %v535
  %537 = vdwg.mxu0
  %540 = vrot.lane.b32.xlu0 %v373, 32
  %v541 = vpop.permute.xlu0 %540
  %542 = vrot.lane.b32.xlu0 %v374, 32
  %v543 = vpop.permute.xlu0 %542
  %v547 = vsel %vm254, %v368, 0
  %v550 = vsel %vm254, %v371, 0
  %552 = vmatpush.msra.mxu0 0.0
  %553 = vmatpush.msra.mxu0 0.0
  %554 = vmatpush.msra.mxu0 0.0
  %555 = vmatpush.msra.mxu0 0.0
  %556 = vmatpush.msra.mxu0 0.0
  %557 = vmatpush.msra.mxu0 0.0
  %558 = vmatpush.msra.mxu0 0.0
  %559 = vmatpush.msra.mxu0 0.0
  %560 = vmatpush.msra.mxu0 0.0
  %561 = vmatpush.msra.mxu0 0.0
  %562 = vmatpush.msra.mxu0 0.0
  %563 = vmatpush.msra.mxu0 0.0
  %564 = vmatpush.msra.mxu0 0.0
  %565 = vmatpush.msra.mxu0 0.0
  %566 = vmatpush.msra.mxu0 %v543
  %567 = vmatpush.msra.mxu0 %v541
  %568 = vmatmul.f32.gmra.mxu0 %v547
  %v569 = vpop.f32.mrf.mxu0
  %v570 = vadd.f32 %v533, %v569
  %571 = vmatmul.f32.gmra.mxu0 %v550
  %v572 = vpop.f32.mrf.mxu0
  %v573 = vadd.f32 %v536, %v572
  %574 = vdwg.mxu0
  %v575 = vadd.f32 %v135, %v570
  %v576 = vadd.f32 %v138, %v573
  %v578 = vperm.slane %v142, 0
  %579 = vrot.lane.b32.xlu0 %v578, 96
  %v580 = vpop.permute.xlu0 %579
  %v582 = vadd.f32 %v575, %v580
  %v583 = vadd.f32 %v576, %v580
  %v584 = vsel %vm144, %v582, 0.0
  %585 = vadd.xlane.f32.xlu0 %v584
  %v586 = vpop.xlane.xlu0 %585
  %v587 = vsel %vm144, %v583, 0.0
  %588 = vadd.xlane.f32.xlu0 %v587
  %v589 = vpop.xlane.xlu0 %588
  %v590 = vmul.f32 %v586, %v157
  %v591 = vmul.f32 %v589, %v157
  %v592 = vsub.f32 %v582, %v590
  %v593 = vsub.f32 %v583, %v591
  %v594 = vmul.f32 %v592, %v592
  %v595 = vmul.f32 %v593, %v593
  %v596 = vsel %vm144, %v594, 0.0
  %597 = vadd.xlane.f32.xlu0 %v596
  %v598 = vpop.xlane.xlu0 %597
  %v599 = vsel %vm144, %v595, 0.0
  %600 = vadd.xlane.f32.xlu0 %v599
  %v601 = vpop.xlane.xlu0 %600
  %v602 = vmul.f32 %v598, %v157
  %v603 = vmul.f32 %v601, %v157
  %v604 = vadd.f32 %v602, 1e-12
  %v605 = vadd.f32 %v603, 1e-12
  %v606 = vrsqrt.pop %v604
  %v607 = vmul.f32 %v606, %v604
  %v608 = vmul.f32 %v607, %v606
  %v609 = vmul.f32 0.5, %v608
  %v610 = vsub.f32 1.5, %v609
  %v611 = vmul.f32 %v606, %v610
  %vm612 = vweird.f32 %v604
  %vm613 = vweird.f32 %v606
  %vm614 = vmor %vm612, %vm613
  %v615 = vsel %vm614, %v606, %v611
  %v616 = vrsqrt.pop %v605
  %v617 = vmul.f32 %v616, %v605
  %v618 = vmul.f32 %v617, %v616
  %v619 = vmul.f32 0.5, %v618
  %v620 = vsub.f32 1.5, %v619
  %v621 = vmul.f32 %v616, %v620
  %vm622 = vweird.f32 %v605
  %vm623 = vweird.f32 %v616
  %vm624 = vmor %vm622, %vm623
  %v625 = vsel %vm624, %v616, %v621
  %v626 = vmul.f32 %v592, %v615
  %v627 = vmul.f32 %v593, %v625
  %628 = vrot.lane.b32.xlu0 %v578, 64
  %v629 = vpop.permute.xlu0 %628
  %v631 = vmul.f32 %v626, %v629
  %v632 = vmul.f32 %v627, %v629
  %633 = vrot.lane.b32.xlu0 %v578, 32
  %v634 = vpop.permute.xlu0 %633
  %v636 = vadd.f32 %v631, %v634
  %v637 = vadd.f32 %v632, %v634
  %v638 = vld [vmem:[%s2 + $0x8] sm:$0xff]
  %v639 = vld [vmem:[%s2 + $0x18] sm:$0xff]
  %v640 = vld [vmem:[%s2 + $0x28] sm:$0xff]
  %v641 = vld [vmem:[%s2 + $0x38] sm:$0xff]
  %v643 = vperm.slane %v143, 0
  %v646 = vsel %vm144, %v636, 0
  %v649 = vsel %vm144, %v637, 0
  %651 = vmatpush.msra.mxu0 0.0
  %652 = vmatpush.msra.mxu0 0.0
  %653 = vmatpush.msra.mxu0 0.0
  %654 = vmatpush.msra.mxu0 0.0
  %655 = vmatpush.msra.mxu0 0.0
  %656 = vmatpush.msra.mxu0 0.0
  %657 = vmatpush.msra.mxu0 0.0
  %658 = vmatpush.msra.mxu0 0.0
  %659 = vmatpush.msra.mxu0 0.0
  %660 = vmatpush.msra.mxu0 0.0
  %661 = vmatpush.msra.mxu0 0.0
  %662 = vmatpush.msra.mxu0 0.0
  %663 = vmatpush.msra.mxu0 %v641
  %664 = vmatpush.msra.mxu0 %v640
  %665 = vmatpush.msra.mxu0 %v639
  %666 = vmatpush.msra.mxu0 %v638
  %667 = vmatmul.f32.gmra.mxu0 %v646
  %v668 = vpop.f32.mrf.mxu0
  %v669 = vadd.f32 %v643, %v668
  %670 = vmatmul.f32.gmra.mxu0 %v649
  %v671 = vpop.f32.mrf.mxu0
  %v672 = vadd.f32 %v643, %v671
  %673 = vdwg.mxu0
  %v674 = vmul.f32 %v669, 0.5
  %v675 = vmul.f32 %v672, 0.5
  %v676 = vmul.f32 %v669, 0.70710677
  %v677 = vmul.f32 %v672, 0.70710677
  %v678 = vand.u32 2147483647, %v676
  %v679 = vand.u32 2147483647, %v677
  %v680 = vmul.f32 %v678, 0.3275911
  %v681 = vmul.f32 %v679, 0.3275911
  %v682 = vadd.f32 %v680, 1.0
  %v683 = vadd.f32 %v681, 1.0
  %v684 = vrcp.pop %v682
  %v685 = vmul.f32 %v682, %v684
  %v686 = vsub.f32 1.0, %v685
  %v687 = vmul.f32 %v684, %v686
  %v688 = vadd.f32 %v684, %v687
  %vm689 = vweird.f32 %v682
  %vm690 = vweird.f32 %v684
  %vm691 = vmor %vm689, %vm690
  %v692 = vsel %vm691, %v684, %v688
  %v693 = vand.u32 2147483647, %v682
  %vm694 = vcmp.eq.f32.partialorder %v693, 8.507059e+37
  %v695 = vand.u32 %v682, 2147483648
  %v696 = vor.u32 1.1754944e-38, %v695
  %v697 = vsel %vm694, %v696, %v692
  %v698 = vmul.f32 1.0, %v697
  %v699 = vrcp.pop %v683
  %v700 = vmul.f32 %v683, %v699
  %v701 = vsub.f32 1.0, %v700
  %v702 = vmul.f32 %v699, %v701
  %v703 = vadd.f32 %v699, %v702
  %vm704 = vweird.f32 %v683
  %vm705 = vweird.f32 %v699
  %vm706 = vmor %vm704, %vm705
  %v707 = vsel %vm706, %v699, %v703
  %v708 = vand.u32 2147483647, %v683
  %vm709 = vcmp.eq.f32.partialorder %v708, 8.507059e+37
  %v710 = vand.u32 %v683, 2147483648
  %v711 = vor.u32 1.1754944e-38, %v710
  %v712 = vsel %vm709, %v711, %v707
  %v713 = vmul.f32 1.0, %v712
  %v714 = vmul.f32 %v698, 1.0614054
  %v715 = vmul.f32 %v713, 1.0614054
  %v716 = vadd.f32 %v714, -1.4531521
  %v717 = vadd.f32 %v715, -1.4531521
  %v718 = vmul.f32 %v698, %v716
  %v719 = vmul.f32 %v713, %v717
  %v720 = vadd.f32 %v718, 1.4214138
  %v721 = vadd.f32 %v719, 1.4214138
  %v722 = vmul.f32 %v698, %v720
  %v723 = vmul.f32 %v713, %v721
  %v724 = vadd.f32 %v722, -0.28449672
  %v725 = vadd.f32 %v723, -0.28449672
  %v726 = vmul.f32 %v698, %v724
  %v727 = vmul.f32 %v713, %v725
  %v728 = vadd.f32 %v726, 0.2548296
  %v729 = vadd.f32 %v727, 0.2548296
  %v730 = vmul.f32 %v698, %v728
  %v731 = vmul.f32 %v713, %v729
  %v732 = vsub.f32 0.0, %v678
  %v733 = vsub.f32 0.0, %v679
  %v734 = vmul.f32 %v732, %v678
  %v735 = vmul.f32 %v733, %v679
  %v736 = vmul.f32 %v734, 1.442695
  %v737 = vpow.pop %v736
  %v738 = vmul.f32 %v735, 1.442695
  %v739 = vpow.pop %v738
  %v740 = vmul.f32 %v730, %v737
  %v741 = vmul.f32 %v731, %v739
  %v742 = vsub.f32 1.0, %v740
  %v743 = vsub.f32 1.0, %v741
  %vm744 = vcmp.lt.f32.partialorder %v676, 0.0
  %vm745 = vcmp.lt.f32.partialorder %v677, 0.0
  %v746 = vsub.f32 0.0, %v742
  %v747 = vsub.f32 0.0, %v743
  %v748 = vsel %vm744, %v746, %v742
  %v749 = vsel %vm745, %v747, %v743
  %v750 = vadd.f32 %v748, 1.0
  %v751 = vadd.f32 %v749, 1.0
  %v752 = vmul.f32 %v674, %v750
  %v753 = vmul.f32 %v675, %v751
  %v754 = vld [vmem:[%s3] sm:$0xff]
  %v755 = vld [vmem:[%s3 + $0x8] sm:$0xff]
  %v756 = vld [vmem:[%s3 + $0x10] sm:$0xff]
  %v757 = vld [vmem:[%s3 + $0x18] sm:$0xff]
  %v758 = vld [vmem:[%s3 + $0x20] sm:$0xff]
  %v759 = vld [vmem:[%s3 + $0x28] sm:$0xff]
  %v760 = vld [vmem:[%s3 + $0x30] sm:$0xff]
  %v761 = vld [vmem:[%s3 + $0x38] sm:$0xff]
  %v763 = vsel %vm87, %v752, 0
  %v766 = vsel %vm87, %v753, 0
  %768 = vmatpush.msra.mxu0 0.0
  %769 = vmatpush.msra.mxu0 0.0
  %770 = vmatpush.msra.mxu0 0.0
  %771 = vmatpush.msra.mxu0 0.0
  %772 = vmatpush.msra.mxu0 0.0
  %773 = vmatpush.msra.mxu0 0.0
  %774 = vmatpush.msra.mxu0 0.0
  %775 = vmatpush.msra.mxu0 0.0
  %776 = vmatpush.msra.mxu0 %v761
  %777 = vmatpush.msra.mxu0 %v760
  %778 = vmatpush.msra.mxu0 %v759
  %779 = vmatpush.msra.mxu0 %v758
  %780 = vmatpush.msra.mxu0 %v757
  %781 = vmatpush.msra.mxu0 %v756
  %782 = vmatpush.msra.mxu0 %v755
  %783 = vmatpush.msra.mxu0 %v754
  %784 = vmatmul.f32.gmra.mxu0 %v763
  %v785 = vpop.f32.mrf.mxu0
  %v786 = vadd.f32 0.0, %v785
  %787 = vmatmul.f32.gmra.mxu0 %v766
  %v788 = vpop.f32.mrf.mxu0
  %v789 = vadd.f32 0.0, %v788
  %790 = vdwg.mxu0
  %v791 = vadd.f32 %v582, %v786
  %v792 = vadd.f32 %v583, %v789
  %793 = vrot.lane.b32.xlu0 %v643, 64
  %v794 = vpop.permute.xlu0 %793
  %v796 = vadd.f32 %v791, %v794
  %v797 = vadd.f32 %v792, %v794
  %s798 = scalar_lea.vmem %s4, 3
  %v799 = vld [vmem:[%s798] sm:$0x1]
  %v800 = vld [vmem:[%s798] sm:$0x3]
  %v801 = vld [vmem:[%s798 + $0x1] sm:$0x1]
  %v802 = vld [vmem:[%s798 + $0x2] sm:$0x1]
  %v803 = vsel %vm144, %v796, 0.0
  %804 = vadd.xlane.f32.xlu0 %v803
  %v805 = vpop.xlane.xlu0 %804
  %v806 = vsel %vm144, %v797, 0.0
  %807 = vadd.xlane.f32.xlu0 %v806
  %v808 = vpop.xlane.xlu0 %807
  %v809 = vmul.f32 %v805, %v157
  %v810 = vmul.f32 %v808, %v157
  %v811 = vsub.f32 %v796, %v809
  %v812 = vsub.f32 %v797, %v810
  %v813 = vmul.f32 %v811, %v811
  %v814 = vmul.f32 %v812, %v812
  %v815 = vsel %vm144, %v813, 0.0
  %816 = vadd.xlane.f32.xlu0 %v815
  %v817 = vpop.xlane.xlu0 %816
  %v818 = vsel %vm144, %v814, 0.0
  %819 = vadd.xlane.f32.xlu0 %v818
  %v820 = vpop.xlane.xlu0 %819
  %v821 = vmul.f32 %v817, %v157
  %v822 = vmul.f32 %v820, %v157
  %v823 = vadd.f32 %v821, 1e-12
  %v824 = vadd.f32 %v822, 1e-12
  %v825 = vrsqrt.pop %v823
  %v826 = vmul.f32 %v825, %v823
  %v827 = vmul.f32 %v826, %v825
  %v828 = vmul.f32 0.5, %v827
  %v829 = vsub.f32 1.5, %v828
  %v830 = vmul.f32 %v825, %v829
  %vm831 = vweird.f32 %v823
  %vm832 = vweird.f32 %v825
  %vm833 = vmor %vm831, %vm832
  %v834 = vsel %vm833, %v825, %v830
  %v835 = vrsqrt.pop %v824
  %v836 = vmul.f32 %v835, %v824
  %v837 = vmul.f32 %v836, %v835
  %v838 = vmul.f32 0.5, %v837
  %v839 = vsub.f32 1.5, %v838
  %v840 = vmul.f32 %v835, %v839
  %vm841 = vweird.f32 %v824
  %vm842 = vweird.f32 %v835
  %vm843 = vmor %vm841, %vm842
  %v844 = vsel %vm843, %v835, %v840
  %v845 = vmul.f32 %v811, %v834
  %v846 = vmul.f32 %v812, %v844
  %v848 = vperm.slane %v799, 0
  %v850 = vmul.f32 %v845, %v848
  %v851 = vmul.f32 %v846, %v848
  %852 = vrot.lane.b32.xlu0 %v848, 96
  %v853 = vpop.permute.xlu0 %852
  %v855 = vadd.f32 %v850, %v853
  %v856 = vadd.f32 %v851, %v853
  %s857 = scalar_lea.vmem %s2, 64
  %v858 = vld [vmem:[%s857] sm:$0xff]
  %v859 = vld [vmem:[%s857 + $0x10] sm:$0xff]
  %v860 = vld [vmem:[%s857 + $0x20] sm:$0xff]
  %v861 = vld [vmem:[%s857 + $0x30] sm:$0xff]
  %v863 = vperm.slane %v800, 0
  %v864 = vperm.slane %v800, 1
  %865 = vrot.lane.b32.xlu0 %v863, 64
  %v866 = vpop.permute.xlu0 %865
  %867 = vrot.lane.b32.xlu0 %v864, 64
  %v868 = vpop.permute.xlu0 %867
  %v869 = vsel %vm87, %v866, %v868
  %v872 = vsel %vm144, %v855, 0
  %v875 = vsel %vm144, %v856, 0
  %877 = vmatpush.msra.mxu0 0.0
  %878 = vmatpush.msra.mxu0 0.0
  %879 = vmatpush.msra.mxu0 0.0
  %880 = vmatpush.msra.mxu0 0.0
  %881 = vmatpush.msra.mxu0 0.0
  %882 = vmatpush.msra.mxu0 0.0
  %883 = vmatpush.msra.mxu0 0.0
  %884 = vmatpush.msra.mxu0 0.0
  %885 = vmatpush.msra.mxu0 0.0
  %886 = vmatpush.msra.mxu0 0.0
  %887 = vmatpush.msra.mxu0 0.0
  %888 = vmatpush.msra.mxu0 0.0
  %889 = vmatpush.msra.mxu0 %v861
  %890 = vmatpush.msra.mxu0 %v860
  %891 = vmatpush.msra.mxu0 %v859
  %892 = vmatpush.msra.mxu0 %v858
  %893 = vmatmul.f32.gmra.mxu0 %v872
  %v894 = vpop.f32.mrf.mxu0
  %v895 = vadd.f32 %v869, %v894
  %896 = vmatmul.f32.gmra.mxu0 %v875
  %v897 = vpop.f32.mrf.mxu0
  %v898 = vadd.f32 %v869, %v897
  %899 = vdwg.mxu0
  %902 = vrot.lane.b32.xlu0 %v895, 96
  %v903 = vpop.permute.xlu0 %902
  %904 = vrot.lane.b32.xlu0 %v898, 96
  %v905 = vpop.permute.xlu0 %904
  %v906 = vsel %vm254, %v895, 0
  %v908 = vsel %vm254, %v898, 0
  %v910 = vsel %vm254, %v903, 0
  %v912 = vsel %vm254, %v905, 0
  %914 = vmatpush.xpose.msra.mxu0 0.0
  %915 = vmatpush.xpose.msra.mxu0 0.0
  %916 = vmatpush.xpose.msra.mxu0 0.0
  %917 = vmatpush.xpose.msra.mxu0 0.0
  %918 = vmatpush.xpose.msra.mxu0 0.0
  %919 = vmatpush.xpose.msra.mxu0 0.0
  %920 = vmatpush.xpose.msra.mxu0 0.0
  %921 = vmatpush.xpose.msra.mxu0 0.0
  %922 = vmatpush.xpose.msra.mxu0 0.0
  %923 = vmatpush.xpose.msra.mxu0 0.0
  %924 = vmatpush.xpose.msra.mxu0 0.0
  %925 = vmatpush.xpose.msra.mxu0 0.0
  %926 = vmatpush.xpose.msra.mxu0 0.0
  %927 = vmatpush.xpose.msra.mxu0 0.0
  %928 = vmatpush.xpose.msra.mxu0 %v912
  %929 = vmatpush.xpose.msra.mxu0 %v910
  %930 = vmatmul.f32.gmra.mxu0 %v906
  %v931 = vpop.f32.mrf.mxu0
  %v932 = vadd.f32 0.0, %v931
  %933 = vmatmul.f32.gmra.mxu0 %v908
  %v934 = vpop.f32.mrf.mxu0
  %v935 = vadd.f32 0.0, %v934
  %936 = vdwg.mxu0
  %v937 = vmul.f32 %v932, 0.25
  %v938 = vmul.f32 %v935, 0.25
  %v939 = vadd.f32 %v937, %v81
  %v940 = vadd.f32 %v938, %v82
  %v941 = vsel %vm254, %v939, -inf
  %942 = vmax.xlane.f32.xlu0 %v941
  %v943 = vpop.xlane.xlu0 %942
  %v944 = vsel %vm254, %v940, -inf
  %945 = vmax.xlane.f32.xlu0 %v944
  %v946 = vpop.xlane.xlu0 %945
  %v947 = vsub.f32 %v939, %v943
  %v948 = vsub.f32 %v940, %v946
  %v949 = vmul.f32 %v947, 1.442695
  %v950 = vpow.pop %v949
  %v951 = vmul.f32 %v948, 1.442695
  %v952 = vpow.pop %v951
  %v953 = vsel %vm254, %v950, 0.0
  %954 = vadd.xlane.f32.xlu0 %v953
  %v955 = vpop.xlane.xlu0 %954
  %v956 = vsel %vm254, %v952, 0.0
  %957 = vadd.xlane.f32.xlu0 %v956
  %v958 = vpop.xlane.xlu0 %957
  %v959 = vrcp.pop %v955
  %v960 = vmul.f32 %v955, %v959
  %v961 = vsub.f32 1.0, %v960
  %v962 = vmul.f32 %v959, %v961
  %v963 = vadd.f32 %v959, %v962
  %vm964 = vweird.f32 %v955
  %vm965 = vweird.f32 %v959
  %vm966 = vmor %vm964, %vm965
  %v967 = vsel %vm966, %v959, %v963
  %v968 = vand.u32 2147483647, %v955
  %vm969 = vcmp.eq.f32.partialorder %v968, 8.507059e+37
  %v970 = vand.u32 %v955, 2147483648
  %v971 = vor.u32 1.1754944e-38, %v970
  %v972 = vsel %vm969, %v971, %v967
  %v973 = vmul.f32 %v950, %v972
  %v974 = vrcp.pop %v958
  %v975 = vmul.f32 %v958, %v974
  %v976 = vsub.f32 1.0, %v975
  %v977 = vmul.f32 %v974, %v976
  %v978 = vadd.f32 %v974, %v977
  %vm979 = vweird.f32 %v958
  %vm980 = vweird.f32 %v974
  %vm981 = vmor %vm979, %vm980
  %v982 = vsel %vm981, %v974, %v978
  %v983 = vand.u32 2147483647, %v958
  %vm984 = vcmp.eq.f32.partialorder %v983, 8.507059e+37
  %v985 = vand.u32 %v958, 2147483648
  %v986 = vor.u32 1.1754944e-38, %v985
  %v987 = vsel %vm984, %v986, %v982
  %v988 = vmul.f32 %v952, %v987
  %989 = vrot.lane.b32.xlu0 %v895, 64
  %v990 = vpop.permute.xlu0 %989
  %991 = vrot.lane.b32.xlu0 %v898, 64
  %v992 = vpop.permute.xlu0 %991
  %v996 = vsel %vm254, %v973, 0
  %v999 = vsel %vm254, %v988, 0
  %1001 = vmatpush.msra.mxu0 0.0
  %1002 = vmatpush.msra.mxu0 0.0
  %1003 = vmatpush.msra.mxu0 0.0
  %1004 = vmatpush.msra.mxu0 0.0
  %1005 = vmatpush.msra.mxu0 0.0
  %1006 = vmatpush.msra.mxu0 0.0
  %1007 = vmatpush.msra.mxu0 0.0
  %1008 = vmatpush.msra.mxu0 0.0
  %1009 = vmatpush.msra.mxu0 0.0
  %1010 = vmatpush.msra.mxu0 0.0
  %1011 = vmatpush.msra.mxu0 0.0
  %1012 = vmatpush.msra.mxu0 0.0
  %1013 = vmatpush.msra.mxu0 0.0
  %1014 = vmatpush.msra.mxu0 0.0
  %1015 = vmatpush.msra.mxu0 %v992
  %1016 = vmatpush.msra.mxu0 %v990
  %1017 = vmatmul.f32.gmra.mxu0 %v996
  %v1018 = vpop.f32.mrf.mxu0
  %v1019 = vadd.f32 0.0, %v1018
  %1020 = vmatmul.f32.gmra.mxu0 %v999
  %v1021 = vpop.f32.mrf.mxu0
  %v1022 = vadd.f32 0.0, %v1021
  %1023 = vdwg.mxu0
  %v1024 = vld [vmem:[%s857] sm:$0xff]
  %v1025 = vld [vmem:[%s857 + $0x10] sm:$0xff]
  %1026 = vrot.lane.b32.xlu0 %v895, 112
  %v1027 = vpop.permute.xlu0 %1026
  %1028 = vrot.lane.b32.xlu0 %v898, 112
  %v1029 = vpop.permute.xlu0 %1028
  %1030 = vrot.lane.b32.xlu0 %v895, 80
  %v1031 = vpop.permute.xlu0 %1030
  %1032 = vrot.lane.b32.xlu0 %v898, 80
  %v1033 = vpop.permute.xlu0 %1032
  %v1034 = vsel %vm254, %v1027, 0
  %v1036 = vsel %vm254, %v1029, 0
  %v1038 = vsel %vm254, %v1031, 0
  %v1040 = vsel %vm254, %v1033, 0
  %1042 = vmatpush.xpose.msra.mxu0 0.0
  %1043 = vmatpush.xpose.msra.mxu0 0.0
  %1044 = vmatpush.xpose.msra.mxu0 0.0
  %1045 = vmatpush.xpose.msra.mxu0 0.0
  %1046 = vmatpush.xpose.msra.mxu0 0.0
  %1047 = vmatpush.xpose.msra.mxu0 0.0
  %1048 = vmatpush.xpose.msra.mxu0 0.0
  %1049 = vmatpush.xpose.msra.mxu0 0.0
  %1050 = vmatpush.xpose.msra.mxu0 0.0
  %1051 = vmatpush.xpose.msra.mxu0 0.0
  %1052 = vmatpush.xpose.msra.mxu0 0.0
  %1053 = vmatpush.xpose.msra.mxu0 0.0
  %1054 = vmatpush.xpose.msra.mxu0 0.0
  %1055 = vmatpush.xpose.msra.mxu0 0.0
  %1056 = vmatpush.xpose.msra.mxu0 %v1040
  %1057 = vmatpush.xpose.msra.mxu0 %v1038
  %1058 = vmatmul.f32.gmra.mxu0 %v1034
  %v1059 = vpop.f32.mrf.mxu0
  %v1060 = vadd.f32 0.0, %v1059
  %1061 = vmatmul.f32.gmra.mxu0 %v1036
  %v1062 = vpop.f32.mrf.mxu0
  %v1063 = vadd.f32 0.0, %v1062
  %1064 = vdwg.mxu0
  %v1065 = vmul.f32 %v1060, 0.25
  %v1066 = vmul.f32 %v1063, 0.25
  %v1067 = vadd.f32 %v1065, %v81
  %v1068 = vadd.f32 %v1066, %v82
  %v1069 = vsel %vm254, %v1067, -inf
  %1070 = vmax.xlane.f32.xlu0 %v1069
  %v1071 = vpop.xlane.xlu0 %1070
  %v1072 = vsel %vm254, %v1068, -inf
  %1073 = vmax.xlane.f32.xlu0 %v1072
  %v1074 = vpop.xlane.xlu0 %1073
  %v1075 = vsub.f32 %v1067, %v1071
  %v1076 = vsub.f32 %v1068, %v1074
  %v1077 = vmul.f32 %v1075, 1.442695
  %v1078 = vpow.pop %v1077
  %v1079 = vmul.f32 %v1076, 1.442695
  %v1080 = vpow.pop %v1079
  %v1081 = vsel %vm254, %v1078, 0.0
  %1082 = vadd.xlane.f32.xlu0 %v1081
  %v1083 = vpop.xlane.xlu0 %1082
  %v1084 = vsel %vm254, %v1080, 0.0
  %1085 = vadd.xlane.f32.xlu0 %v1084
  %v1086 = vpop.xlane.xlu0 %1085
  %v1087 = vrcp.pop %v1083
  %v1088 = vmul.f32 %v1083, %v1087
  %v1089 = vsub.f32 1.0, %v1088
  %v1090 = vmul.f32 %v1087, %v1089
  %v1091 = vadd.f32 %v1087, %v1090
  %vm1092 = vweird.f32 %v1083
  %vm1093 = vweird.f32 %v1087
  %vm1094 = vmor %vm1092, %vm1093
  %v1095 = vsel %vm1094, %v1087, %v1091
  %v1096 = vand.u32 2147483647, %v1083
  %vm1097 = vcmp.eq.f32.partialorder %v1096, 8.507059e+37
  %v1098 = vand.u32 %v1083, 2147483648
  %v1099 = vor.u32 1.1754944e-38, %v1098
  %v1100 = vsel %vm1097, %v1099, %v1095
  %v1101 = vmul.f32 %v1078, %v1100
  %v1102 = vrcp.pop %v1086
  %v1103 = vmul.f32 %v1086, %v1102
  %v1104 = vsub.f32 1.0, %v1103
  %v1105 = vmul.f32 %v1102, %v1104
  %v1106 = vadd.f32 %v1102, %v1105
  %vm1107 = vweird.f32 %v1086
  %vm1108 = vweird.f32 %v1102
  %vm1109 = vmor %vm1107, %vm1108
  %v1110 = vsel %vm1109, %v1102, %v1106
  %v1111 = vand.u32 2147483647, %v1086
  %vm1112 = vcmp.eq.f32.partialorder %v1111, 8.507059e+37
  %v1113 = vand.u32 %v1086, 2147483648
  %v1114 = vor.u32 1.1754944e-38, %v1113
  %v1115 = vsel %vm1112, %v1114, %v1110
  %v1116 = vmul.f32 %v1080, %v1115
  %1117 = vrot.lane.b32.xlu0 %v895, 48
  %v1118 = vpop.permute.xlu0 %1117
  %1119 = vrot.lane.b32.xlu0 %v898, 48
  %v1120 = vpop.permute.xlu0 %1119
  %v1124 = vsel %vm254, %v1101, 0
  %v1127 = vsel %vm254, %v1116, 0
  %1129 = vmatpush.msra.mxu0 0.0
  %1130 = vmatpush.msra.mxu0 0.0
  %1131 = vmatpush.msra.mxu0 0.0
  %1132 = vmatpush.msra.mxu0 0.0
  %1133 = vmatpush.msra.mxu0 0.0
  %1134 = vmatpush.msra.mxu0 0.0
  %1135 = vmatpush.msra.mxu0 0.0
  %1136 = vmatpush.msra.mxu0 0.0
  %1137 = vmatpush.msra.mxu0 0.0
  %1138 = vmatpush.msra.mxu0 0.0
  %1139 = vmatpush.msra.mxu0 0.0
  %1140 = vmatpush.msra.mxu0 0.0
  %1141 = vmatpush.msra.mxu0 0.0
  %1142 = vmatpush.msra.mxu0 0.0
  %1143 = vmatpush.msra.mxu0 %v1120
  %1144 = vmatpush.msra.mxu0 %v1118
  %1145 = vmatmul.f32.gmra.mxu0 %v1124
  %v1146 = vpop.f32.mrf.mxu0
  %v1147 = vadd.f32 0.0, %v1146
  %1148 = vmatmul.f32.gmra.mxu0 %v1127
  %v1149 = vpop.f32.mrf.mxu0
  %v1150 = vadd.f32 0.0, %v1149
  %1151 = vdwg.mxu0
  %1154 = vrot.lane.b32.xlu0 %v860, 32
  %v1155 = vpop.permute.xlu0 %1154
  %1156 = vrot.lane.b32.xlu0 %v861, 32
  %v1157 = vpop.permute.xlu0 %1156
  %v1161 = vsel %vm254, %v1147, 0
  %v1164 = vsel %vm254, %v1150, 0
  %1166 = vmatpush.msra.mxu0 0.0
  %1167 = vmatpush.msra.mxu0 0.0
  %1168 = vmatpush.msra.mxu0 0.0
  %1169 = vmatpush.msra.mxu0 0.0
  %1170 = vmatpush.msra.mxu0 0.0
  %1171 = vmatpush.msra.mxu0 0.0
  %1172 = vmatpush.msra.mxu0 0.0
  %1173 = vmatpush.msra.mxu0 0.0
  %1174 = vmatpush.msra.mxu0 0.0
  %1175 = vmatpush.msra.mxu0 0.0
  %1176 = vmatpush.msra.mxu0 0.0
  %1177 = vmatpush.msra.mxu0 0.0
  %1178 = vmatpush.msra.mxu0 0.0
  %1179 = vmatpush.msra.mxu0 0.0
  %1180 = vmatpush.msra.mxu0 %v1157
  %1181 = vmatpush.msra.mxu0 %v1155
  %1182 = vmatmul.f32.gmra.mxu0 %v1161
  %v1183 = vpop.f32.mrf.mxu0
  %v1184 = vadd.f32 0.0, %v1183
  %1185 = vmatmul.f32.gmra.mxu0 %v1164
  %v1186 = vpop.f32.mrf.mxu0
  %v1187 = vadd.f32 0.0, %v1186
  %1188 = vdwg.mxu0
  %1191 = vrot.lane.b32.xlu0 %v1024, 32
  %v1192 = vpop.permute.xlu0 %1191
  %1193 = vrot.lane.b32.xlu0 %v1025, 32
  %v1194 = vpop.permute.xlu0 %1193
  %v1198 = vsel %vm254, %v1019, 0
  %v1201 = vsel %vm254, %v1022, 0
  %1203 = vmatpush.msra.mxu0 0.0
  %1204 = vmatpush.msra.mxu0 0.0
  %1205 = vmatpush.msra.mxu0 0.0
  %1206 = vmatpush.msra.mxu0 0.0
  %1207 = vmatpush.msra.mxu0 0.0
  %1208 = vmatpush.msra.mxu0 0.0
  %1209 = vmatpush.msra.mxu0 0.0
  %1210 = vmatpush.msra.mxu0 0.0
  %1211 = vmatpush.msra.mxu0 0.0
  %1212 = vmatpush.msra.mxu0 0.0
  %1213 = vmatpush.msra.mxu0 0.0
  %1214 = vmatpush.msra.mxu0 0.0
  %1215 = vmatpush.msra.mxu0 0.0
  %1216 = vmatpush.msra.mxu0 0.0
  %1217 = vmatpush.msra.mxu0 %v1194
  %1218 = vmatpush.msra.mxu0 %v1192
  %1219 = vmatmul.f32.gmra.mxu0 %v1198
  %v1220 = vpop.f32.mrf.mxu0
  %v1221 = vadd.f32 %v1184, %v1220
  %1222 = vmatmul.f32.gmra.mxu0 %v1201
  %v1223 = vpop.f32.mrf.mxu0
  %v1224 = vadd.f32 %v1187, %v1223
  %1225 = vdwg.mxu0
  %v1226 = vadd.f32 %v796, %v1221
  %v1227 = vadd.f32 %v797, %v1224
  %v1229 = vperm.slane %v801, 0
  %1230 = vrot.lane.b32.xlu0 %v1229, 96
  %v1231 = vpop.permute.xlu0 %1230
  %v1233 = vadd.f32 %v1226, %v1231
  %v1234 = vadd.f32 %v1227, %v1231
  %v1235 = vsel %vm144, %v1233, 0.0
  %1236 = vadd.xlane.f32.xlu0 %v1235
  %v1237 = vpop.xlane.xlu0 %1236
  %v1238 = vsel %vm144, %v1234, 0.0
  %1239 = vadd.xlane.f32.xlu0 %v1238
  %v1240 = vpop.xlane.xlu0 %1239
  %v1241 = vmul.f32 %v1237, %v157
  %v1242 = vmul.f32 %v1240, %v157
  %v1243 = vsub.f32 %v1233, %v1241
  %v1244 = vsub.f32 %v1234, %v1242
  %v1245 = vmul.f32 %v1243, %v1243
  %v1246 = vmul.f32 %v1244, %v1244
  %v1247 = vsel %vm144, %v1245, 0.0
  %1248 = vadd.xlane.f32.xlu0 %v1247
  %v1249 = vpop.xlane.xlu0 %1248
  %v1250 = vsel %vm144, %v1246, 0.0
  %1251 = vadd.xlane.f32.xlu0 %v1250
  %v1252 = vpop.xlane.xlu0 %1251
  %v1253 = vmul.f32 %v1249, %v157
  %v1254 = vmul.f32 %v1252, %v157
  %v1255 = vadd.f32 %v1253, 1e-12
  %v1256 = vadd.f32 %v1254, 1e-12
  %v1257 = vrsqrt.pop %v1255
  %v1258 = vmul.f32 %v1257, %v1255
  %v1259 = vmul.f32 %v1258, %v1257
  %v1260 = vmul.f32 0.5, %v1259
  %v1261 = vsub.f32 1.5, %v1260
  %v1262 = vmul.f32 %v1257, %v1261
  %vm1263 = vweird.f32 %v1255
  %vm1264 = vweird.f32 %v1257
  %vm1265 = vmor %vm1263, %vm1264
  %v1266 = vsel %vm1265, %v1257, %v1262
  %v1267 = vrsqrt.pop %v1256
  %v1268 = vmul.f32 %v1267, %v1256
  %v1269 = vmul.f32 %v1268, %v1267
  %v1270 = vmul.f32 0.5, %v1269
  %v1271 = vsub.f32 1.5, %v1270
  %v1272 = vmul.f32 %v1267, %v1271
  %vm1273 = vweird.f32 %v1256
  %vm1274 = vweird.f32 %v1267
  %vm1275 = vmor %vm1273, %vm1274
  %v1276 = vsel %vm1275, %v1267, %v1272
  %v1277 = vmul.f32 %v1243, %v1266
  %v1278 = vmul.f32 %v1244, %v1276
  %1279 = vrot.lane.b32.xlu0 %v1229, 64
  %v1280 = vpop.permute.xlu0 %1279
  %v1282 = vmul.f32 %v1277, %v1280
  %v1283 = vmul.f32 %v1278, %v1280
  %1284 = vrot.lane.b32.xlu0 %v1229, 32
  %v1285 = vpop.permute.xlu0 %1284
  %v1287 = vadd.f32 %v1282, %v1285
  %v1288 = vadd.f32 %v1283, %v1285
  %v1289 = vld [vmem:[%s857 + $0x8] sm:$0xff]
  %v1290 = vld [vmem:[%s857 + $0x18] sm:$0xff]
  %v1291 = vld [vmem:[%s857 + $0x28] sm:$0xff]
  %v1292 = vld [vmem:[%s857 + $0x38] sm:$0xff]
  %v1294 = vperm.slane %v802, 0
  %v1297 = vsel %vm144, %v1287, 0
  %v1300 = vsel %vm144, %v1288, 0
  %1302 = vmatpush.msra.mxu0 0.0
  %1303 = vmatpush.msra.mxu0 0.0
  %1304 = vmatpush.msra.mxu0 0.0
  %1305 = vmatpush.msra.mxu0 0.0
  %1306 = vmatpush.msra.mxu0 0.0
  %1307 = vmatpush.msra.mxu0 0.0
  %1308 = vmatpush.msra.mxu0 0.0
  %1309 = vmatpush.msra.mxu0 0.0
  %1310 = vmatpush.msra.mxu0 0.0
  %1311 = vmatpush.msra.mxu0 0.0
  %1312 = vmatpush.msra.mxu0 0.0
  %1313 = vmatpush.msra.mxu0 0.0
  %1314 = vmatpush.msra.mxu0 %v1292
  %1315 = vmatpush.msra.mxu0 %v1291
  %1316 = vmatpush.msra.mxu0 %v1290
  %1317 = vmatpush.msra.mxu0 %v1289
  %1318 = vmatmul.f32.gmra.mxu0 %v1297
  %v1319 = vpop.f32.mrf.mxu0
  %v1320 = vadd.f32 %v1294, %v1319
  %1321 = vmatmul.f32.gmra.mxu0 %v1300
  %v1322 = vpop.f32.mrf.mxu0
  %v1323 = vadd.f32 %v1294, %v1322
  %1324 = vdwg.mxu0
  %v1325 = vmul.f32 %v1320, 0.5
  %v1326 = vmul.f32 %v1323, 0.5
  %v1327 = vmul.f32 %v1320, 0.70710677
  %v1328 = vmul.f32 %v1323, 0.70710677
  %v1329 = vand.u32 2147483647, %v1327
  %v1330 = vand.u32 2147483647, %v1328
  %v1331 = vmul.f32 %v1329, 0.3275911
  %v1332 = vmul.f32 %v1330, 0.3275911
  %v1333 = vadd.f32 %v1331, 1.0
  %v1334 = vadd.f32 %v1332, 1.0
  %v1335 = vrcp.pop %v1333
  %v1336 = vmul.f32 %v1333, %v1335
  %v1337 = vsub.f32 1.0, %v1336
  %v1338 = vmul.f32 %v1335, %v1337
  %v1339 = vadd.f32 %v1335, %v1338
  %vm1340 = vweird.f32 %v1333
  %vm1341 = vweird.f32 %v1335
  %vm1342 = vmor %vm1340, %vm1341
  %v1343 = vsel %vm1342, %v1335, %v1339
  %v1344 = vand.u32 2147483647, %v1333
  %vm1345 = vcmp.eq.f32.partialorder %v1344, 8.507059e+37
  %v1346 = vand.u32 %v1333, 2147483648
  %v1347 = vor.u32 1.1754944e-38, %v1346
  %v1348 = vsel %vm1345, %v1347, %v1343
  %v1349 = vmul.f32 1.0, %v1348
  %v1350 = vrcp.pop %v1334
  %v1351 = vmul.f32 %v1334, %v1350
  %v1352 = vsub.f32 1.0, %v1351
  %v1353 = vmul.f32 %v1350, %v1352
  %v1354 = vadd.f32 %v1350, %v1353
  %vm1355 = vweird.f32 %v1334
  %vm1356 = vweird.f32 %v1350
  %vm1357 = vmor %vm1355, %vm1356
  %v1358 = vsel %vm1357, %v1350, %v1354
  %v1359 = vand.u32 2147483647, %v1334
  %vm1360 = vcmp.eq.f32.partialorder %v1359, 8.507059e+37
  %v1361 = vand.u32 %v1334, 2147483648
  %v1362 = vor.u32 1.1754944e-38, %v1361
  %v1363 = vsel %vm1360, %v1362, %v1358
  %v1364 = vmul.f32 1.0, %v1363
  %v1365 = vmul.f32 %v1349, 1.0614054
  %v1366 = vmul.f32 %v1364, 1.0614054
  %v1367 = vadd.f32 %v1365, -1.4531521
  %v1368 = vadd.f32 %v1366, -1.4531521
  %v1369 = vmul.f32 %v1349, %v1367
  %v1370 = vmul.f32 %v1364, %v1368
  %v1371 = vadd.f32 %v1369, 1.4214138
  %v1372 = vadd.f32 %v1370, 1.4214138
  %v1373 = vmul.f32 %v1349, %v1371
  %v1374 = vmul.f32 %v1364, %v1372
  %v1375 = vadd.f32 %v1373, -0.28449672
  %v1376 = vadd.f32 %v1374, -0.28449672
  %v1377 = vmul.f32 %v1349, %v1375
  %v1378 = vmul.f32 %v1364, %v1376
  %v1379 = vadd.f32 %v1377, 0.2548296
  %v1380 = vadd.f32 %v1378, 0.2548296
  %v1381 = vmul.f32 %v1349, %v1379
  %v1382 = vmul.f32 %v1364, %v1380
  %v1383 = vsub.f32 0.0, %v1329
  %v1384 = vsub.f32 0.0, %v1330
  %v1385 = vmul.f32 %v1383, %v1329
  %v1386 = vmul.f32 %v1384, %v1330
  %v1387 = vmul.f32 %v1385, 1.442695
  %v1388 = vpow.pop %v1387
  %v1389 = vmul.f32 %v1386, 1.442695
  %v1390 = vpow.pop %v1389
  %v1391 = vmul.f32 %v1381, %v1388
  %v1392 = vmul.f32 %v1382, %v1390
  %v1393 = vsub.f32 1.0, %v1391
  %v1394 = vsub.f32 1.0, %v1392
  %vm1395 = vcmp.lt.f32.partialorder %v1327, 0.0
  %vm1396 = vcmp.lt.f32.partialorder %v1328, 0.0
  %v1397 = vsub.f32 0.0, %v1393
  %v1398 = vsub.f32 0.0, %v1394
  %v1399 = vsel %vm1395, %v1397, %v1393
  %v1400 = vsel %vm1396, %v1398, %v1394
  %v1401 = vadd.f32 %v1399, 1.0
  %v1402 = vadd.f32 %v1400, 1.0
  %v1403 = vmul.f32 %v1325, %v1401
  %v1404 = vmul.f32 %v1326, %v1402
  %s1405 = scalar_lea.vmem %s3, 64
  %v1406 = vld [vmem:[%s1405] sm:$0xff]
  %v1407 = vld [vmem:[%s1405 + $0x8] sm:$0xff]
  %v1408 = vld [vmem:[%s1405 + $0x10] sm:$0xff]
  %v1409 = vld [vmem:[%s1405 + $0x18] sm:$0xff]
  %v1410 = vld [vmem:[%s1405 + $0x20] sm:$0xff]
  %v1411 = vld [vmem:[%s1405 + $0x28] sm:$0xff]
  %v1412 = vld [vmem:[%s1405 + $0x30] sm:$0xff]
  %v1413 = vld [vmem:[%s1405 + $0x38] sm:$0xff]
  %v1415 = vsel %vm87, %v1403, 0
  %v1418 = vsel %vm87, %v1404, 0
  %1420 = vmatpush.msra.mxu0 0.0
  %1421 = vmatpush.msra.mxu0 0.0
  %1422 = vmatpush.msra.mxu0 0.0
  %1423 = vmatpush.msra.mxu0 0.0
  %1424 = vmatpush.msra.mxu0 0.0
  %1425 = vmatpush.msra.mxu0 0.0
  %1426 = vmatpush.msra.mxu0 0.0
  %1427 = vmatpush.msra.mxu0 0.0
  %1428 = vmatpush.msra.mxu0 %v1413
  %1429 = vmatpush.msra.mxu0 %v1412
  %1430 = vmatpush.msra.mxu0 %v1411
  %1431 = vmatpush.msra.mxu0 %v1410
  %1432 = vmatpush.msra.mxu0 %v1409
  %1433 = vmatpush.msra.mxu0 %v1408
  %1434 = vmatpush.msra.mxu0 %v1407
  %1435 = vmatpush.msra.mxu0 %v1406
  %1436 = vmatmul.f32.gmra.mxu0 %v1415
  %v1437 = vpop.f32.mrf.mxu0
  %v1438 = vadd.f32 0.0, %v1437
  %1439 = vmatmul.f32.gmra.mxu0 %v1418
  %v1440 = vpop.f32.mrf.mxu0
  %v1441 = vadd.f32 0.0, %v1440
  %1442 = vdwg.mxu0
  %v1443 = vadd.f32 %v1233, %v1438
  %v1444 = vadd.f32 %v1234, %v1441
  %1445 = vrot.lane.b32.xlu0 %v1294, 64
  %v1446 = vpop.permute.xlu0 %1445
  %v1448 = vadd.f32 %v1443, %v1446
  %v1449 = vadd.f32 %v1444, %v1446
  %v1450 = vsel %vm144, %v1448, 0.0
  %1451 = vadd.xlane.f32.xlu0 %v1450
  %v1452 = vpop.xlane.xlu0 %1451
  %v1453 = vsel %vm144, %v1449, 0.0
  %1454 = vadd.xlane.f32.xlu0 %v1453
  %v1455 = vpop.xlane.xlu0 %1454
  %v1456 = vmul.f32 %v1452, %v157
  %v1457 = vmul.f32 %v1455, %v157
  %v1458 = vsub.f32 %v1448, %v1456
  %v1459 = vsub.f32 %v1449, %v1457
  %v1460 = vmul.f32 %v1458, %v1458
  %v1461 = vmul.f32 %v1459, %v1459
  %v1462 = vsel %vm144, %v1460, 0.0
  %1463 = vadd.xlane.f32.xlu0 %v1462
  %v1464 = vpop.xlane.xlu0 %1463
  %v1465 = vsel %vm144, %v1461, 0.0
  %1466 = vadd.xlane.f32.xlu0 %v1465
  %v1467 = vpop.xlane.xlu0 %1466
  %v1468 = vmul.f32 %v1464, %v157
  %v1469 = vmul.f32 %v1467, %v157
  %v1470 = vadd.f32 %v1468, 1e-12
  %v1471 = vadd.f32 %v1469, 1e-12
  %v1472 = vrsqrt.pop %v1470
  %v1473 = vmul.f32 %v1472, %v1470
  %v1474 = vmul.f32 %v1473, %v1472
  %v1475 = vmul.f32 0.5, %v1474
  %v1476 = vsub.f32 1.5, %v1475
  %v1477 = vmul.f32 %v1472, %v1476
  %vm1478 = vweird.f32 %v1470
  %vm1479 = vweird.f32 %v1472
  %vm1480 = vmor %vm1478, %vm1479
  %v1481 = vsel %vm1480, %v1472, %v1477
  %v1482 = vrsqrt.pop %v1471
  %v1483 = vmul.f32 %v1482, %v1471
  %v1484 = vmul.f32 %v1483, %v1482
  %v1485 = vmul.f32 0.5, %v1484
  %v1486 = vsub.f32 1.5, %v1485
  %v1487 = vmul.f32 %v1482, %v1486
  %vm1488 = vweird.f32 %v1471
  %vm1489 = vweird.f32 %v1482
  %vm1490 = vmor %vm1488, %vm1489
  %v1491 = vsel %vm1490, %v1482, %v1487
  %v1492 = vmul.f32 %v1458, %v1481
  %v1493 = vmul.f32 %v1459, %v1491
  %v1494 = vperm.slane %v49, 0
  %v1495 = vmul.f32 %v1492, %v1494
  %v1496 = vmul.f32 %v1493, %v1494
  %v1497 = vperm.slane %v50, 0
  %v1498 = vadd.f32 %v1495, %v1497
  %v1499 = vadd.f32 %v1496, %v1497
  %v1500 = vld [vmem:[%s5] sm:$0xff]
  %v1501 = vld [vmem:[%s5 + $0x8] sm:$0xff]
  %v1502 = vld [vmem:[%s5 + $0x10] sm:$0xff]
  %v1503 = vld [vmem:[%s5 + $0x18] sm:$0xff]
  %v1504 = vld [vmem:[%s5 + $0x20] sm:$0x1]
  %v1505 = vperm.slane %v1504, 0
  %v1507 = vsel %vm144, %v1498, 0
  %v1510 = vsel %vm144, %v1499, 0
  %1512 = vmatpush.msra.mxu0 0.0
  %1513 = vmatpush.msra.mxu0 0.0
  %1514 = vmatpush.msra.mxu0 0.0
  %1515 = vmatpush.msra.mxu0 0.0
  %1516 = vmatpush.msra.mxu0 0.0
  %1517 = vmatpush.msra.mxu0 0.0
  %1518 = vmatpush.msra.mxu0 0.0
  %1519 = vmatpush.msra.mxu0 0.0
  %1520 = vmatpush.msra.mxu0 0.0
  %1521 = vmatpush.msra.mxu0 0.0
  %1522 = vmatpush.msra.mxu0 0.0
  %1523 = vmatpush.msra.mxu0 0.0
  %1524 = vmatpush.msra.mxu0 %v1503
  %1525 = vmatpush.msra.mxu0 %v1502
  %1526 = vmatpush.msra.mxu0 %v1501
  %1527 = vmatpush.msra.mxu0 %v1500
  %1528 = vmatmul.f32.gmra.mxu0 %v1507
  %v1529 = vpop.f32.mrf.mxu0
  %v1530 = vadd.f32 %v1505, %v1529
  %1531 = vmatmul.f32.gmra.mxu0 %v1510
  %v1532 = vpop.f32.mrf.mxu0
  %v1533 = vadd.f32 %v1505, %v1532
  %1534 = vdwg.mxu0
  %1535 = vst [vmem:[%s6] sm:$0xff] %v1530
  %1536 = vst [vmem:[%s6 + $0x8] sm:$0xff] %v1533
  // Predicated region
  $region26: #{vit_wrapper_forward.1} parent=0 // pred_check
    _
  $region27: #{vit_wrapper_forward.1} parent=0 // pred_check_branch
    %1538 = sbr.rel (0) target = $region29
  $region28: #{vit_wrapper_forward.1} parent=0 // pred_region
    _
  $region29: #{vit_wrapper_forward.1} parent=0 // pred_fallthru
    _
  // Predicated region
  $region30: #{vit_wrapper_forward.1} parent=0 // pred_check
    _
  $region31: #{vit_wrapper_forward.1} parent=0 // pred_check_branch
    %1540 = sbr.rel (0) target = $region33
  $region32: #{vit_wrapper_forward.1} parent=0 // pred_region
    _
  $region33: #{vit_wrapper_forward.1} parent=0 // pred_fallthru
    _

</llo_original>
